<compile_context>
chip_gen: v7x
topology: tpu7x:2x2x1
jax: 0.10.0
libtpu: 0.0.40
codegen_flags: <defaults>
</compile_context>

<pallas_src>
import jax
import jax.numpy as jnp
from jax.experimental import pallas as pl
from jax.experimental.pallas import tpu as pltpu

_LANE = 128  # TPU lane width


def _make_elementwise_kernel(run_func, compute_dtype):
    """Kernel body: apply run_func to the current VMEM tile."""
    def kernel(x_ref, o_ref):
        x = x_ref[...]
        if compute_dtype is not None:
            # v5e has no bf16 VPU/EUP ops; do the math in f32 (free here:
            # the kernel is memory-bound, the VPU/EUP have ample slack).
            x = x.astype(compute_dtype)
        o_ref[...] = run_func(x).astype(o_ref.dtype)
    return kernel


def _pallas_apply(run_func, x, *, target_block_rows=2048):
    """Apply a shape-preserving run_func to x via a tiled Pallas kernel."""
    in_dtype = x.dtype
    n = x.size
    if n == 0:
        return run_func(x)

    # Determine output dtype abstractly so a dtype-changing run_func matches
    # the PyTorch module's behaviour exactly.
    out_abs = jax.eval_shape(run_func, jax.ShapeDtypeStruct(x.shape, in_dtype))
    if out_abs.shape != x.shape:
        # TODO(synk): run_func is fully arbitrary in the original module; a
        # non-shape-preserving run_func (e.g. a whole sub-network / reduction)
        # has no generic tiled-elementwise Pallas equivalent, so fall back to
        # plain JAX for it.
        return run_func(x)
    out_dtype = out_abs.dtype

    # Lane-dense slab [rows, 128].  When n % 128 == 0 (typical for NCHW
    # feature maps) the reshape is metadata-only: no extra HBM pass.
    padded = (n % _LANE) != 0
    if padded:
        pad = (-n) % _LANE
        flat = jnp.concatenate(
            [jnp.reshape(x, (-1,)), jnp.zeros((pad,), dtype=in_dtype)])
        slab = jnp.reshape(flat, (-1, _LANE))
    else:
        slab = jnp.reshape(x, (-1, _LANE))
    rows = slab.shape[0]

    # Block sizing: ~1 MiB blocks so the kernel rides the HBM roofline rather
    # than the ~0.35 us/step grid overhead.  tile_rows is a multiple of 32
    # (packed sublane granularity for bf16/int8); the ragged last block is
    # masked by Pallas, so no row-padding copies are needed.
    if rows >= 32:
        tile_rows = min(target_block_rows, (rows // 32) * 32)
        # Keep >=2 grid steps when there's enough work so the parallel grid
        # axis can be split across the 2 TensorCores per chip on v7x.
        if rows >= 64 and pl.cdiv(rows, tile_rows) < 2:
            tile_rows = max(32, ((tile_rows // 2 + 31) // 32) * 32)
    else:
        # Tiny slab: a single full-extent block (always legal).
        tile_rows = rows
    grid = (pl.cdiv(rows, tile_rows),)

    compute_dtype = None
    if jnp.issubdtype(in_dtype, jnp.floating) and jnp.dtype(in_dtype).itemsize < 4:
        compute_dtype = jnp.float32

    kernel = _make_elementwise_kernel(run_func, compute_dtype)

    out = pl.pallas_call(
        kernel,
        out_shape=jax.ShapeDtypeStruct((rows, _LANE), out_dtype),
        grid_spec=pltpu.PrefetchScalarGridSpec(
            num_scalar_prefetch=0,
            grid=grid,
            # Default double buffering is enough to hide HBM latency at this
            # block size; bump to pl.Buffered(3) only if xprof shows exposed DMA.
            in_specs=[pl.BlockSpec((tile_rows, _LANE), lambda i: (i, 0))],
            out_specs=pl.BlockSpec((tile_rows, _LANE), lambda i: (i, 0)),
        ),
        compiler_params=pltpu.CompilerParams(
            dimension_semantics=("parallel",)),
    )(slab)

    if padded:
        # NOTE: padded elements do go through run_func (NaN/Inf from e.g. log
        # at 0 is harmless) and are sliced off here; never accumulate across
        # padded lanes.
        return jnp.reshape(jnp.reshape(out, (-1,))[:n], x.shape)
    return jnp.reshape(out, x.shape)


class FunctionWrapper:
    """JAX/Pallas equivalent of the PyTorch FunctionWrapper module.

    forward(x) = run_func(x), with run_func evaluated inside a Pallas kernel
    for large inputs; tiny inputs bypass the kernel (plain XLA fuses them).
    """

    def __init__(self, run_func, *, min_pallas_elems=32768):
        self.run_func = run_func
        self.min_pallas_elems = min_pallas_elems

    def __call__(self, x):
        if x.size < self.min_pallas_elems:
            # Small-input fast path: pallas_call launch + layout plumbing
            # dwarfs the work at this size.
            return self.run_func(x)
        return _pallas_apply(self.run_func, x)

    # alias to mirror nn.Module.forward
    forward = __call__


if __name__ == "__main__":
    key = jax.random.PRNGKey(0)
    k1, k2 = jax.random.split(key)

    # Representative elementwise run_func: SiLU (x * sigmoid(x)).
    run_func = lambda t: t * jax.nn.sigmoid(t)

    model = FunctionWrapper(run_func)

    # 1) Small NCHW input (matches the module spec) — takes the fast path.
    x_small = jax.random.normal(key, (2, 4, 16, 16), dtype=jnp.float32)
    y_small = jax.block_until_ready(model(x_small))
    assert y_small.shape == x_small.shape and y_small.dtype == x_small.dtype
    assert jnp.allclose(y_small, run_func(x_small), atol=1e-6, rtol=1e-6)

    # 2) Larger NCHW feature map — exercises the Pallas kernel with a
    #    multi-step parallel grid and a ragged (masked) last block.
    x_big = jax.random.normal(k1, (4, 32, 63, 64), dtype=jnp.float32)
    y_big = jax.block_until_ready(model(x_big))
    assert y_big.shape == x_big.shape and y_big.dtype == x_big.dtype
    assert jnp.allclose(y_big, run_func(x_big), atol=1e-6, rtol=1e-6)

    # 3) bf16 input through the kernel (exercises the f32-compute path).
    x_bf16 = x_big.astype(jnp.bfloat16)
    y_bf16 = jax.block_until_ready(model(x_bf16))
    assert y_bf16.shape == x_bf16.shape and y_bf16.dtype == jnp.bfloat16
    assert jnp.allclose(y_bf16.astype(jnp.float32),
                        run_func(x_bf16).astype(jnp.float32),
                        atol=0.25, rtol=0.1)

    # 4) Force the Pallas path on a small, non-128-divisible input to cover
    #    the lane-pad / single-block code path.
    forced = FunctionWrapper(run_func, min_pallas_elems=0)
    x_odd = jax.random.normal(k2, (2, 3, 17, 19), dtype=jnp.float32)
    y_odd = jax.block_until_ready(forced(x_odd))
    assert y_odd.shape == x_odd.shape and y_odd.dtype == x_odd.dtype
    assert jnp.allclose(y_odd, run_func(x_odd), atol=1e-6, rtol=1e-6)

    print("KERNEL_OK")
</pallas_src>

<mosaic_0001>
module attributes {stable_mosaic.version = 11 : i64} {
  func.func @kernel(%arg0: i32, %arg1: memref<2048x128xf32, #tpu.memory_space<vmem>>, %arg2: memref<2048x128xf32, #tpu.memory_space<vmem>>) attributes {dimension_semantics = [#tpu.dimension_semantics<parallel>], iteration_bounds = array<i64: 2>, scalar_prefetch = 0 : i64, scratch_operands = 0 : i64, tpu.core_type = #tpu.core_type<tc>, window_params = [{transform_indices = @transform_0, window_bounds = array<i64: 2048, 128>}, {transform_indices = @transform_1, window_bounds = array<i64: 2048, 128>}]} {
    %c0 = arith.constant 0 : index
    %c0_0 = arith.constant 0 : index
    %0 = vector.load %arg1[%c0, %c0_0] : memref<2048x128xf32, #tpu.memory_space<vmem>>, vector<2048x128xf32>
    %1 = arith.negf %0 : vector<2048x128xf32>
    %2 = math.exp %1 : vector<2048x128xf32>
    %cst = arith.constant 1.000000e+00 : f32
    %3 = vector.broadcast %cst : f32 to vector<2048x128xf32>
    %4 = arith.addf %3, %2 : vector<2048x128xf32>
    %5 = arith.divf %3, %4 : vector<2048x128xf32>
    %6 = arith.mulf %0, %5 : vector<2048x128xf32>
    %c0_1 = arith.constant 0 : index
    %c0_2 = arith.constant 0 : index
    %7 = vector.load %arg2[%c0_1, %c0_2] : memref<2048x128xf32, #tpu.memory_space<vmem>>, vector<2048x128xf32>
    tpu.vector_store %arg2[%c0_1, %c0_2], %6 {strides = array<i32>} : memref<2048x128xf32, #tpu.memory_space<vmem>>, vector<2048x128xf32>,
    return
  }
  func.func @transform_0(%arg0: i32) -> (i32, i32) {
    %c0_i32 = arith.constant 0 : i32
    %c0_i32_0 = arith.constant 0 : i32
    return %arg0, %c0_i32 : i32, i32
  }
  func.func @transform_1(%arg0: i32) -> (i32, i32) {
    %c0_i32 = arith.constant 0 : i32
    %c0_i32_0 = arith.constant 0 : i32
    return %arg0, %c0_i32 : i32, i32
  }
}

</mosaic_0001>

<llo_original>
// kernel: tpu_custom_call.1
$region0: #{tpu_custom_call.1}
  #allocation0 [shape = 'u32[]', space=smem, size = 0x4, offset = 0x4, fixed_abs, tag = 'smem constant byte address 0x4 - core index']
  #allocation1 [shape = 'u32[144,128]{1,0:T(1,128)}', space=vmem, size = 0x12000, scoped, tag = 'internal scratch']
  %s0 = inlined_call_operand.hbm [shape: f32[4032,128], index: 0, kind: input, shape index: {}]
  %s1 = inlined_call_operand.hbm [shape: f32[4032,128], index: 1, kind: output, shape index: {}]
  %s2 = sld [smem:[#allocation0]]
  $region41: #{tpu_custom_call.1} parent=0
    _
  %s4 = ssub.s32 1, %s2
  %s5 = scalar_select 0, %s4, %s2
  $region1: #{tpu_custom_call.1} parent=0
    #allocation2 [shape = 'u8[2097152]{0}', space=vmem, size = 0x200000, scoped, tag = 'input window, operand 0']
    #allocation3 [shape = 's32[2]{0}', space=sflag, size = 0x8, scoped, tag = 'scoped memory for tpu_custom_call.1']
    #allocation4 [shape = 's32[2]{0}', space=sflag, size = 0x8, scoped, tag = 'scoped memory for tpu_custom_call.1']
    #allocation5 [shape = 'u8[2097152]{0}', space=vmem, size = 0x200000, scoped, tag = 'output window, operand 0']
    %6 = vsyncpa [#allocation3], 0
    %s7 = scalar_lea.sflag [#allocation3], 1
    %8 = vsyncpa %s7, 0
    %9 = vsyncpa [#allocation4], 0
    %s10 = scalar_lea.sflag [#allocation4], 1
    %11 = vsyncpa %s10, 0
    loop: start=0, step=1, limit=4
    $region2: #{tpu_custom_call.1} parent=1 // loop_pre_header
      _
    $region3: #{tpu_custom_call.1} parent=1 // loop_header
      %s13 = sphi 0, %s17
      %p14 = scmp.ge.s32.totalorder %s13, 4
      %s23 = sphi 0, %s25
      %s26 = sphi 0, %s23
      %s27 = sphi 0, %s26
      %s43 = sphi 0, %s27
      %s49 = sphi 0, %s51
      %s52 = sphi 0, %s49
      %s53 = sphi 0, %s52
      %s69 = sphi 0, %s53
    $region4: #{tpu_custom_call.1} parent=1 // loop_header_branch
      %16 = sbr.rel (%p14) target = $region8
    $region5: #{tpu_custom_call.1} parent=1 // loop_body
      %s18 = ssub.s32 %s13, 1
      %s19 = ssub.s32 %s13, 2
      %s20 = sadd.s32 %s13, 1
      %s21 = ssub.s32 %s13, %s20
      %p22 = scmp.eq.s32.totalorder %s21, 0
      %s24 = sadd.s32 %s23, 1
      %s25 = scalar_select %p22, %s23, %s24
      %p28 = pneg %p22
      %p29 = scmp.eq.s32.totalorder %s13, 1
      %p30 = por %p28, %p29
      %p31 = scmp.ne.s32.totalorder %s23, %s26
      %p32 = scmp.eq.s32.totalorder %s13, 0
      %p33 = por %p31, %p32
      %p34 = scmp.ne.s32.totalorder %s23, %s26
      %p35 = scmp.eq.s32.totalorder %s18, 1
      %p36 = por %p34, %p35
      %p37 = scmp.ne.s32.totalorder %s26, %s27
      %p38 = scmp.eq.s32.totalorder %s18, 0
      %p39 = por %p37, %p38
      %p40 = scmp.ne.s32.totalorder %s26, %s27
      %p41 = scmp.eq.s32.totalorder %s19, 1
      %p42 = por %p40, %p41
      %p44 = scmp.ne.s32.totalorder %s27, %s43
      %p45 = scmp.eq.s32.totalorder %s19, 0
      %p46 = por %p44, %p45
      %s47 = ssub.s32 %s13, %s20
      %p48 = scmp.eq.s32.totalorder %s47, 0
      %s50 = sadd.s32 %s49, 1
      %s51 = scalar_select %p48, %s49, %s50
      %p54 = pneg %p48
      %p55 = scmp.eq.s32.totalorder %s13, 1
      %p56 = por %p54, %p55
      %p57 = scmp.ne.s32.totalorder %s49, %s52
      %p58 = scmp.eq.s32.totalorder %s13, 0
      %p59 = por %p57, %p58
      %p60 = scmp.ne.s32.totalorder %s49, %s52
      %p61 = scmp.eq.s32.totalorder %s18, 1
      %p62 = por %p60, %p61
      %p63 = scmp.ne.s32.totalorder %s52, %s53
      %p64 = scmp.eq.s32.totalorder %s18, 0
      %p65 = por %p63, %p64
      %p66 = scmp.ne.s32.totalorder %s52, %s53
      %p67 = scmp.eq.s32.totalorder %s19, 1
      %p68 = por %p66, %p67
      %p70 = scmp.ne.s32.totalorder %s53, %s69
      %p71 = scmp.eq.s32.totalorder %s19, 0
      %p72 = por %p70, %p71
      %p73 = scmp.le.s32.totalorder 1, %s13
      %p74 = scmp.lt.s32.totalorder %s13, 3
      %p75 = pnand %p73, %p74
      %p76 = pneg %p75
      // Predicated region
      $region9: #{tpu_custom_call.1} parent=5 // pred_check
        _
      $region10: #{tpu_custom_call.1} parent=5 // pred_check_branch
        %78 = sbr.rel (%p75) target = $region12
      $region11: #{tpu_custom_call.1} parent=5 // pred_region
        %s79 = ssub.s32 %s13, 1
      $region12: #{tpu_custom_call.1} parent=5 // pred_fallthru
        _
      %p80 = scmp.lt.s32.totalorder %s13, 2
      // Predicated region
      $region13: #{tpu_custom_call.1} parent=5 // pred_check
        %p81 = pneg %p80
      $region14: #{tpu_custom_call.1} parent=5 // pred_check_branch
        %83 = sbr.rel (%p81) target = $region16
      $region15: #{tpu_custom_call.1} parent=5 // pred_region
        // Predicated region
        $region17: #{tpu_custom_call.1} parent=15 // pred_check
          %p84 = pneg %p33
        $region18: #{tpu_custom_call.1} parent=15 // pred_check_branch
          %86 = sbr.rel (%p84) target = $region20
        $region19: #{tpu_custom_call.1} parent=15 // pred_region
          %s87 = sand.u32 %s23, 1
          %s88 = scalar_lea.sflag [#allocation3], %s87
          %s89 = sand.u32 %s23, 1
          %s90 = smul.addr %s89, 2048
          %s91 = scalar_lea.vmem [#allocation2], %s90
          %s92 = smul.u32 256, %s13
          %s93 = ssub.s32 504, %s92
          %p94 = scmp.lt.s32.totalorder %s93, 256
          %s95 = scalar_select %p94, %s93, 256
          %s96 = smul.u32 128, %s95
          %s98 = ssub.s32 32768, %s96
          %99 = vsyncadd %s88, %s98
          %p100 = scmp.ne.s32.totalorder 0, %s96
          %s101 = smul.addr %s92, 128
          %s102 = scalar_lea.hbm %s0, %s101
          %s103 = smul.u32 8, %s95
          %s104 = sshll.u32 %s91, 4
          %s105 = int_to_ptr.vmem [resolvable:$true] %s104
          %s106 = sshll.u32 %s103, 4
          %110 = dma.hbm_to_vmem [thread:$0]  (%p100), %s102, %s106, %s105, %s88, 128, 128, 8
        $region20: #{tpu_custom_call.1} parent=15 // pred_fallthru
          _
      $region16: #{tpu_custom_call.1} parent=5 // pred_fallthru
        _
      %p111 = scmp.le.s32.totalorder 1, %s13
      %p112 = scmp.lt.s32.totalorder %s13, 3
      %p113 = pnand %p111, %p112
      %p114 = pneg %p113
      // Predicated region
      $region21: #{tpu_custom_call.1} parent=5 // pred_check
        _
      $region22: #{tpu_custom_call.1} parent=5 // pred_check_branch
        %116 = sbr.rel (%p113) target = $region24
      $region23: #{tpu_custom_call.1} parent=5 // pred_region
        %s117 = ssub.s32 %s13, 1
        %s118 = sand.u32 %s26, 1
        %s119 = scalar_lea.sflag [#allocation3], %s118
        %s120 = sand.u32 %s26, 1
        %s121 = smul.addr %s120, 2048
        %s122 = scalar_lea.vmem [#allocation2], %s121
        // Predicated region
        $region25: #{tpu_custom_call.1} parent=23 // pred_check
          %p123 = pneg %p39
        $region26: #{tpu_custom_call.1} parent=23 // pred_check_branch
          %125 = sbr.rel (%p123) target = $region28
        $region27: #{tpu_custom_call.1} parent=23 // pred_region
          %126 = dma.done %s119, 32768
        $region28: #{tpu_custom_call.1} parent=23 // pred_fallthru
          _
        %s127 = sand.u32 %s26, 1
        %s128 = scalar_lea.sflag [#allocation3], %s127
        %s129 = sand.u32 %s26, 1
        %s130 = smul.addr %s129, 2048
        %s131 = scalar_lea.vmem [#allocation2], %s130
        %p132 = pneg %p39
        %p133 = pneg %p36
        %p134 = pneg %p65
        %p135 = pneg %p62
        %s136 = sand.u32 %s52, 1
        %s137 = scalar_lea.sflag [#allocation4], %s136
        %s138 = sand.u32 %s52, 1
        %s139 = smul.addr %s138, 2048
        %s140 = scalar_lea.vmem [#allocation5], %s139
        %s141 = smul.u32 256, %s18
        %s142 = ssub.s32 504, %s141
        %p143 = scmp.lt.s32.totalorder %s142, 256
        %s144 = scalar_select %p143, %s142, 256
        %s145 = smul.u32 128, %s144
        %s146 = smul.u32 256, %s18
        %s147 = ssub.s32 504, %s146
        %p148 = scmp.lt.s32.totalorder %s147, 256
        %s149 = scalar_select %p148, %s147, 256
        %s150 = smul.u32 128, %s149
        %v151 = vld [vmem:[%s122] sm:$0xff]
        %v152 = vld [vmem:[%s122 + $0x8] sm:$0xff]
        %v153 = vld [vmem:[%s122 + $0x10] sm:$0xff]
        %v154 = vld [vmem:[%s122 + $0x18] sm:$0xff]
        %v155 = vld [vmem:[%s122 + $0x20] sm:$0xff]
        %v156 = vld [vmem:[%s122 + $0x28] sm:$0xff]
        %v157 = vld [vmem:[%s122 + $0x30] sm:$0xff]
        %v158 = vld [vmem:[%s122 + $0x38] sm:$0xff]
        %v159 = vld [vmem:[%s122 + $0x40] sm:$0xff]
        %v160 = vld [vmem:[%s122 + $0x48] sm:$0xff]
        %v161 = vld [vmem:[%s122 + $0x50] sm:$0xff]
        %v162 = vld [vmem:[%s122 + $0x58] sm:$0xff]
        %v163 = vld [vmem:[%s122 + $0x60] sm:$0xff]
        %v164 = vld [vmem:[%s122 + $0x68] sm:$0xff]
        %v165 = vld [vmem:[%s122 + $0x70] sm:$0xff]
        %v166 = vld [vmem:[%s122 + $0x78] sm:$0xff]
        %v167 = vld [vmem:[%s122 + $0x80] sm:$0xff]
        %v168 = vld [vmem:[%s122 + $0x88] sm:$0xff]
        %v169 = vld [vmem:[%s122 + $0x90] sm:$0xff]
        %v170 = vld [vmem:[%s122 + $0x98] sm:$0xff]
        %v171 = vld [vmem:[%s122 + $0xa0] sm:$0xff]
        %v172 = vld [vmem:[%s122 + $0xa8] sm:$0xff]
        %v173 = vld [vmem:[%s122 + $0xb0] sm:$0xff]
        %v174 = vld [vmem:[%s122 + $0xb8] sm:$0xff]
        %v175 = vld [vmem:[%s122 + $0xc0] sm:$0xff]
        %v176 = vld [vmem:[%s122 + $0xc8] sm:$0xff]
        %v177 = vld [vmem:[%s122 + $0xd0] sm:$0xff]
        %v178 = vld [vmem:[%s122 + $0xd8] sm:$0xff]
        %v179 = vld [vmem:[%s122 + $0xe0] sm:$0xff]
        %v180 = vld [vmem:[%s122 + $0xe8] sm:$0xff]
        %v181 = vld [vmem:[%s122 + $0xf0] sm:$0xff]
        %v182 = vld [vmem:[%s122 + $0xf8] sm:$0xff]
        %v183 = vld [vmem:[%s122 + $0x100] sm:$0xff]
        %v184 = vld [vmem:[%s122 + $0x108] sm:$0xff]
        %v185 = vld [vmem:[%s122 + $0x110] sm:$0xff]
        %v186 = vld [vmem:[%s122 + $0x118] sm:$0xff]
        %v187 = vld [vmem:[%s122 + $0x120] sm:$0xff]
        %v188 = vld [vmem:[%s122 + $0x128] sm:$0xff]
        %v189 = vld [vmem:[%s122 + $0x130] sm:$0xff]
        %v190 = vld [vmem:[%s122 + $0x138] sm:$0xff]
        %v191 = vld [vmem:[%s122 + $0x140] sm:$0xff]
        %v192 = vld [vmem:[%s122 + $0x148] sm:$0xff]
        %v193 = vld [vmem:[%s122 + $0x150] sm:$0xff]
        %v194 = vld [vmem:[%s122 + $0x158] sm:$0xff]
        %v195 = vld [vmem:[%s122 + $0x160] sm:$0xff]
        %v196 = vld [vmem:[%s122 + $0x168] sm:$0xff]
        %v197 = vld [vmem:[%s122 + $0x170] sm:$0xff]
        %v198 = vld [vmem:[%s122 + $0x178] sm:$0xff]
        %v199 = vld [vmem:[%s122 + $0x180] sm:$0xff]
        %v200 = vld [vmem:[%s122 + $0x188] sm:$0xff]
        %v201 = vld [vmem:[%s122 + $0x190] sm:$0xff]
        %v202 = vld [vmem:[%s122 + $0x198] sm:$0xff]
        %v203 = vld [vmem:[%s122 + $0x1a0] sm:$0xff]
        %v204 = vld [vmem:[%s122 + $0x1a8] sm:$0xff]
        %v205 = vld [vmem:[%s122 + $0x1b0] sm:$0xff]
        %v206 = vld [vmem:[%s122 + $0x1b8] sm:$0xff]
        %v207 = vld [vmem:[%s122 + $0x1c0] sm:$0xff]
        %v208 = vld [vmem:[%s122 + $0x1c8] sm:$0xff]
        %v209 = vld [vmem:[%s122 + $0x1d0] sm:$0xff]
        %v210 = vld [vmem:[%s122 + $0x1d8] sm:$0xff]
        %v211 = vld [vmem:[%s122 + $0x1e0] sm:$0xff]
        %v212 = vld [vmem:[%s122 + $0x1e8] sm:$0xff]
        %v213 = vld [vmem:[%s122 + $0x1f0] sm:$0xff]
        %v214 = vld [vmem:[%s122 + $0x1f8] sm:$0xff]
        %v215 = vld [vmem:[%s122 + $0x200] sm:$0xff]
        %v216 = vld [vmem:[%s122 + $0x208] sm:$0xff]
        %v217 = vld [vmem:[%s122 + $0x210] sm:$0xff]
        %v218 = vld [vmem:[%s122 + $0x218] sm:$0xff]
        %v219 = vld [vmem:[%s122 + $0x220] sm:$0xff]
        %v220 = vld [vmem:[%s122 + $0x228] sm:$0xff]
        %v221 = vld [vmem:[%s122 + $0x230] sm:$0xff]
        %v222 = vld [vmem:[%s122 + $0x238] sm:$0xff]
        %v223 = vld [vmem:[%s122 + $0x240] sm:$0xff]
        %v224 = vld [vmem:[%s122 + $0x248] sm:$0xff]
        %v225 = vld [vmem:[%s122 + $0x250] sm:$0xff]
        %v226 = vld [vmem:[%s122 + $0x258] sm:$0xff]
        %v227 = vld [vmem:[%s122 + $0x260] sm:$0xff]
        %v228 = vld [vmem:[%s122 + $0x268] sm:$0xff]
        %v229 = vld [vmem:[%s122 + $0x270] sm:$0xff]
        %v230 = vld [vmem:[%s122 + $0x278] sm:$0xff]
        %v231 = vld [vmem:[%s122 + $0x280] sm:$0xff]
        %v232 = vld [vmem:[%s122 + $0x288] sm:$0xff]
        %v233 = vld [vmem:[%s122 + $0x290] sm:$0xff]
        %v234 = vld [vmem:[%s122 + $0x298] sm:$0xff]
        %v235 = vld [vmem:[%s122 + $0x2a0] sm:$0xff]
        %v236 = vld [vmem:[%s122 + $0x2a8] sm:$0xff]
        %v237 = vld [vmem:[%s122 + $0x2b0] sm:$0xff]
        %v238 = vld [vmem:[%s122 + $0x2b8] sm:$0xff]
        %v239 = vld [vmem:[%s122 + $0x2c0] sm:$0xff]
        %v240 = vld [vmem:[%s122 + $0x2c8] sm:$0xff]
        %v241 = vld [vmem:[%s122 + $0x2d0] sm:$0xff]
        %v242 = vld [vmem:[%s122 + $0x2d8] sm:$0xff]
        %v243 = vld [vmem:[%s122 + $0x2e0] sm:$0xff]
        %v244 = vld [vmem:[%s122 + $0x2e8] sm:$0xff]
        %v245 = vld [vmem:[%s122 + $0x2f0] sm:$0xff]
        %v246 = vld [vmem:[%s122 + $0x2f8] sm:$0xff]
        %v247 = vld [vmem:[%s122 + $0x300] sm:$0xff]
        %v248 = vld [vmem:[%s122 + $0x308] sm:$0xff]
        %v249 = vld [vmem:[%s122 + $0x310] sm:$0xff]
        %v250 = vld [vmem:[%s122 + $0x318] sm:$0xff]
        %v251 = vld [vmem:[%s122 + $0x320] sm:$0xff]
        %v252 = vld [vmem:[%s122 + $0x328] sm:$0xff]
        %v253 = vld [vmem:[%s122 + $0x330] sm:$0xff]
        %v254 = vld [vmem:[%s122 + $0x338] sm:$0xff]
        %v255 = vld [vmem:[%s122 + $0x340] sm:$0xff]
        %v256 = vld [vmem:[%s122 + $0x348] sm:$0xff]
        %v257 = vld [vmem:[%s122 + $0x350] sm:$0xff]
        %v258 = vld [vmem:[%s122 + $0x358] sm:$0xff]
        %v259 = vld [vmem:[%s122 + $0x360] sm:$0xff]
        %v260 = vld [vmem:[%s122 + $0x368] sm:$0xff]
        %v261 = vld [vmem:[%s122 + $0x370] sm:$0xff]
        %v262 = vld [vmem:[%s122 + $0x378] sm:$0xff]
        %v263 = vld [vmem:[%s122 + $0x380] sm:$0xff]
        %v264 = vld [vmem:[%s122 + $0x388] sm:$0xff]
        %v265 = vld [vmem:[%s122 + $0x390] sm:$0xff]
        %v266 = vld [vmem:[%s122 + $0x398] sm:$0xff]
        %v267 = vld [vmem:[%s122 + $0x3a0] sm:$0xff]
        %v268 = vld [vmem:[%s122 + $0x3a8] sm:$0xff]
        %v269 = vld [vmem:[%s122 + $0x3b0] sm:$0xff]
        %v270 = vld [vmem:[%s122 + $0x3b8] sm:$0xff]
        %v271 = vld [vmem:[%s122 + $0x3c0] sm:$0xff]
        %v272 = vld [vmem:[%s122 + $0x3c8] sm:$0xff]
        %v273 = vld [vmem:[%s122 + $0x3d0] sm:$0xff]
        %v274 = vld [vmem:[%s122 + $0x3d8] sm:$0xff]
        %v275 = vld [vmem:[%s122 + $0x3e0] sm:$0xff]
        %v276 = vld [vmem:[%s122 + $0x3e8] sm:$0xff]
        %v277 = vld [vmem:[%s122 + $0x3f0] sm:$0xff]
        %v278 = vld [vmem:[%s122 + $0x3f8] sm:$0xff]
        %v279 = vld [vmem:[%s122 + $0x400] sm:$0xff]
        %v280 = vld [vmem:[%s122 + $0x408] sm:$0xff]
        %v281 = vld [vmem:[%s122 + $0x410] sm:$0xff]
        %v282 = vld [vmem:[%s122 + $0x418] sm:$0xff]
        %v283 = vld [vmem:[%s122 + $0x420] sm:$0xff]
        %v284 = vld [vmem:[%s122 + $0x428] sm:$0xff]
        %v285 = vld [vmem:[%s122 + $0x430] sm:$0xff]
        %v286 = vld [vmem:[%s122 + $0x438] sm:$0xff]
        %v287 = vld [vmem:[%s122 + $0x440] sm:$0xff]
        %v288 = vld [vmem:[%s122 + $0x448] sm:$0xff]
        %v289 = vld [vmem:[%s122 + $0x450] sm:$0xff]
        %v290 = vld [vmem:[%s122 + $0x458] sm:$0xff]
        %v291 = vld [vmem:[%s122 + $0x460] sm:$0xff]
        %v292 = vld [vmem:[%s122 + $0x468] sm:$0xff]
        %v293 = vld [vmem:[%s122 + $0x470] sm:$0xff]
        %v294 = vld [vmem:[%s122 + $0x478] sm:$0xff]
        %v295 = vld [vmem:[%s122 + $0x480] sm:$0xff]
        %v296 = vld [vmem:[%s122 + $0x488] sm:$0xff]
        %v297 = vld [vmem:[%s122 + $0x490] sm:$0xff]
        %v298 = vld [vmem:[%s122 + $0x498] sm:$0xff]
        %v299 = vld [vmem:[%s122 + $0x4a0] sm:$0xff]
        %v300 = vld [vmem:[%s122 + $0x4a8] sm:$0xff]
        %v301 = vld [vmem:[%s122 + $0x4b0] sm:$0xff]
        %v302 = vld [vmem:[%s122 + $0x4b8] sm:$0xff]
        %v303 = vld [vmem:[%s122 + $0x4c0] sm:$0xff]
        %v304 = vld [vmem:[%s122 + $0x4c8] sm:$0xff]
        %v305 = vld [vmem:[%s122 + $0x4d0] sm:$0xff]
        %v306 = vld [vmem:[%s122 + $0x4d8] sm:$0xff]
        %v307 = vld [vmem:[%s122 + $0x4e0] sm:$0xff]
        %v308 = vld [vmem:[%s122 + $0x4e8] sm:$0xff]
        %v309 = vld [vmem:[%s122 + $0x4f0] sm:$0xff]
        %v310 = vld [vmem:[%s122 + $0x4f8] sm:$0xff]
        %v311 = vld [vmem:[%s122 + $0x500] sm:$0xff]
        %v312 = vld [vmem:[%s122 + $0x508] sm:$0xff]
        %v313 = vld [vmem:[%s122 + $0x510] sm:$0xff]
        %v314 = vld [vmem:[%s122 + $0x518] sm:$0xff]
        %v315 = vld [vmem:[%s122 + $0x520] sm:$0xff]
        %v316 = vld [vmem:[%s122 + $0x528] sm:$0xff]
        %v317 = vld [vmem:[%s122 + $0x530] sm:$0xff]
        %v318 = vld [vmem:[%s122 + $0x538] sm:$0xff]
        %v319 = vld [vmem:[%s122 + $0x540] sm:$0xff]
        %v320 = vld [vmem:[%s122 + $0x548] sm:$0xff]
        %v321 = vld [vmem:[%s122 + $0x550] sm:$0xff]
        %v322 = vld [vmem:[%s122 + $0x558] sm:$0xff]
        %v323 = vld [vmem:[%s122 + $0x560] sm:$0xff]
        %v324 = vld [vmem:[%s122 + $0x568] sm:$0xff]
        %v325 = vld [vmem:[%s122 + $0x570] sm:$0xff]
        %v326 = vld [vmem:[%s122 + $0x578] sm:$0xff]
        %v327 = vld [vmem:[%s122 + $0x580] sm:$0xff]
        %v328 = vld [vmem:[%s122 + $0x588] sm:$0xff]
        %v329 = vld [vmem:[%s122 + $0x590] sm:$0xff]
        %v330 = vld [vmem:[%s122 + $0x598] sm:$0xff]
        %v331 = vld [vmem:[%s122 + $0x5a0] sm:$0xff]
        %v332 = vld [vmem:[%s122 + $0x5a8] sm:$0xff]
        %v333 = vld [vmem:[%s122 + $0x5b0] sm:$0xff]
        %v334 = vld [vmem:[%s122 + $0x5b8] sm:$0xff]
        %v335 = vld [vmem:[%s122 + $0x5c0] sm:$0xff]
        %v336 = vld [vmem:[%s122 + $0x5c8] sm:$0xff]
        %v337 = vld [vmem:[%s122 + $0x5d0] sm:$0xff]
        %v338 = vld [vmem:[%s122 + $0x5d8] sm:$0xff]
        %v339 = vld [vmem:[%s122 + $0x5e0] sm:$0xff]
        %v340 = vld [vmem:[%s122 + $0x5e8] sm:$0xff]
        %v341 = vld [vmem:[%s122 + $0x5f0] sm:$0xff]
        %v342 = vld [vmem:[%s122 + $0x5f8] sm:$0xff]
        %v343 = vld [vmem:[%s122 + $0x600] sm:$0xff]
        %v344 = vld [vmem:[%s122 + $0x608] sm:$0xff]
        %v345 = vld [vmem:[%s122 + $0x610] sm:$0xff]
        %v346 = vld [vmem:[%s122 + $0x618] sm:$0xff]
        %v347 = vld [vmem:[%s122 + $0x620] sm:$0xff]
        %v348 = vld [vmem:[%s122 + $0x628] sm:$0xff]
        %v349 = vld [vmem:[%s122 + $0x630] sm:$0xff]
        %v350 = vld [vmem:[%s122 + $0x638] sm:$0xff]
        %v351 = vld [vmem:[%s122 + $0x640] sm:$0xff]
        %v352 = vld [vmem:[%s122 + $0x648] sm:$0xff]
        %v353 = vld [vmem:[%s122 + $0x650] sm:$0xff]
        %v354 = vld [vmem:[%s122 + $0x658] sm:$0xff]
        %v355 = vld [vmem:[%s122 + $0x660] sm:$0xff]
        %v356 = vld [vmem:[%s122 + $0x668] sm:$0xff]
        %v357 = vld [vmem:[%s122 + $0x670] sm:$0xff]
        %v358 = vld [vmem:[%s122 + $0x678] sm:$0xff]
        %v359 = vld [vmem:[%s122 + $0x680] sm:$0xff]
        %v360 = vld [vmem:[%s122 + $0x688] sm:$0xff]
        %v361 = vld [vmem:[%s122 + $0x690] sm:$0xff]
        %v362 = vld [vmem:[%s122 + $0x698] sm:$0xff]
        %v363 = vld [vmem:[%s122 + $0x6a0] sm:$0xff]
        %v364 = vld [vmem:[%s122 + $0x6a8] sm:$0xff]
        %v365 = vld [vmem:[%s122 + $0x6b0] sm:$0xff]
        %v366 = vld [vmem:[%s122 + $0x6b8] sm:$0xff]
        %v367 = vld [vmem:[%s122 + $0x6c0] sm:$0xff]
        %v368 = vld [vmem:[%s122 + $0x6c8] sm:$0xff]
        %v369 = vld [vmem:[%s122 + $0x6d0] sm:$0xff]
        %v370 = vld [vmem:[%s122 + $0x6d8] sm:$0xff]
        %v371 = vld [vmem:[%s122 + $0x6e0] sm:$0xff]
        %v372 = vld [vmem:[%s122 + $0x6e8] sm:$0xff]
        %v373 = vld [vmem:[%s122 + $0x6f0] sm:$0xff]
        %v374 = vld [vmem:[%s122 + $0x6f8] sm:$0xff]
        %v375 = vld [vmem:[%s122 + $0x700] sm:$0xff]
        %v376 = vld [vmem:[%s122 + $0x708] sm:$0xff]
        %v377 = vld [vmem:[%s122 + $0x710] sm:$0xff]
        %v378 = vld [vmem:[%s122 + $0x718] sm:$0xff]
        %v379 = vld [vmem:[%s122 + $0x720] sm:$0xff]
        %v380 = vld [vmem:[%s122 + $0x728] sm:$0xff]
        %v381 = vld [vmem:[%s122 + $0x730] sm:$0xff]
        %v382 = vld [vmem:[%s122 + $0x738] sm:$0xff]
        %v383 = vld [vmem:[%s122 + $0x740] sm:$0xff]
        %v384 = vld [vmem:[%s122 + $0x748] sm:$0xff]
        %v385 = vld [vmem:[%s122 + $0x750] sm:$0xff]
        %v386 = vld [vmem:[%s122 + $0x758] sm:$0xff]
        %v387 = vld [vmem:[%s122 + $0x760] sm:$0xff]
        %v388 = vld [vmem:[%s122 + $0x768] sm:$0xff]
        %v389 = vld [vmem:[%s122 + $0x770] sm:$0xff]
        %v390 = vld [vmem:[%s122 + $0x778] sm:$0xff]
        %v391 = vld [vmem:[%s122 + $0x780] sm:$0xff]
        %v392 = vld [vmem:[%s122 + $0x788] sm:$0xff]
        %v393 = vld [vmem:[%s122 + $0x790] sm:$0xff]
        %v394 = vld [vmem:[%s122 + $0x798] sm:$0xff]
        %v395 = vld [vmem:[%s122 + $0x7a0] sm:$0xff]
        %v396 = vld [vmem:[%s122 + $0x7a8] sm:$0xff]
        %v397 = vld [vmem:[%s122 + $0x7b0] sm:$0xff]
        %v398 = vld [vmem:[%s122 + $0x7b8] sm:$0xff]
        %v399 = vld [vmem:[%s122 + $0x7c0] sm:$0xff]
        %v400 = vld [vmem:[%s122 + $0x7c8] sm:$0xff]
        %v401 = vld [vmem:[%s122 + $0x7d0] sm:$0xff]
        %v402 = vld [vmem:[%s122 + $0x7d8] sm:$0xff]
        %v403 = vld [vmem:[%s122 + $0x7e0] sm:$0xff]
        %v404 = vld [vmem:[%s122 + $0x7e8] sm:$0xff]
        %v405 = vld [vmem:[%s122 + $0x7f0] sm:$0xff]
        %v406 = vld [vmem:[%s122 + $0x7f8] sm:$0xff]
        %v407 = vxor.u32 %v151, 2147483648
        %v408 = vxor.u32 %v152, 2147483648
        %v409 = vxor.u32 %v153, 2147483648
        %v410 = vxor.u32 %v154, 2147483648
        %v411 = vxor.u32 %v155, 2147483648
        %v412 = vxor.u32 %v156, 2147483648
        %v413 = vxor.u32 %v157, 2147483648
        %v414 = vxor.u32 %v158, 2147483648
        %v415 = vxor.u32 %v159, 2147483648
        %v416 = vxor.u32 %v160, 2147483648
        %v417 = vxor.u32 %v161, 2147483648
        %v418 = vxor.u32 %v162, 2147483648
        %v419 = vxor.u32 %v163, 2147483648
        %v420 = vxor.u32 %v164, 2147483648
        %v421 = vxor.u32 %v165, 2147483648
        %v422 = vxor.u32 %v166, 2147483648
        %v423 = vxor.u32 %v167, 2147483648
        %v424 = vxor.u32 %v168, 2147483648
        %v425 = vxor.u32 %v169, 2147483648
        %v426 = vxor.u32 %v170, 2147483648
        %v427 = vxor.u32 %v171, 2147483648
        %v428 = vxor.u32 %v172, 2147483648
        %v429 = vxor.u32 %v173, 2147483648
        %v430 = vxor.u32 %v174, 2147483648
        %v431 = vxor.u32 %v175, 2147483648
        %v432 = vxor.u32 %v176, 2147483648
        %v433 = vxor.u32 %v177, 2147483648
        %v434 = vxor.u32 %v178, 2147483648
        %v435 = vxor.u32 %v179, 2147483648
        %v436 = vxor.u32 %v180, 2147483648
        %v437 = vxor.u32 %v181, 2147483648
        %v438 = vxor.u32 %v182, 2147483648
        %v439 = vxor.u32 %v183, 2147483648
        %v440 = vxor.u32 %v184, 2147483648
        %v441 = vxor.u32 %v185, 2147483648
        %v442 = vxor.u32 %v186, 2147483648
        %v443 = vxor.u32 %v187, 2147483648
        %v444 = vxor.u32 %v188, 2147483648
        %v445 = vxor.u32 %v189, 2147483648
        %v446 = vxor.u32 %v190, 2147483648
        %v447 = vxor.u32 %v191, 2147483648
        %v448 = vxor.u32 %v192, 2147483648
        %v449 = vxor.u32 %v193, 2147483648
        %v450 = vxor.u32 %v194, 2147483648
        %v451 = vxor.u32 %v195, 2147483648
        %v452 = vxor.u32 %v196, 2147483648
        %v453 = vxor.u32 %v197, 2147483648
        %v454 = vxor.u32 %v198, 2147483648
        %v455 = vxor.u32 %v199, 2147483648
        %v456 = vxor.u32 %v200, 2147483648
        %v457 = vxor.u32 %v201, 2147483648
        %v458 = vxor.u32 %v202, 2147483648
        %v459 = vxor.u32 %v203, 2147483648
        %v460 = vxor.u32 %v204, 2147483648
        %v461 = vxor.u32 %v205, 2147483648
        %v462 = vxor.u32 %v206, 2147483648
        %v463 = vxor.u32 %v207, 2147483648
        %v464 = vxor.u32 %v208, 2147483648
        %v465 = vxor.u32 %v209, 2147483648
        %v466 = vxor.u32 %v210, 2147483648
        %v467 = vxor.u32 %v211, 2147483648
        %v468 = vxor.u32 %v212, 2147483648
        %v469 = vxor.u32 %v213, 2147483648
        %v470 = vxor.u32 %v214, 2147483648
        %v471 = vxor.u32 %v215, 2147483648
        %v472 = vxor.u32 %v216, 2147483648
        %v473 = vxor.u32 %v217, 2147483648
        %v474 = vxor.u32 %v218, 2147483648
        %v475 = vxor.u32 %v219, 2147483648
        %v476 = vxor.u32 %v220, 2147483648
        %v477 = vxor.u32 %v221, 2147483648
        %v478 = vxor.u32 %v222, 2147483648
        %v479 = vxor.u32 %v223, 2147483648
        %v480 = vxor.u32 %v224, 2147483648
        %v481 = vxor.u32 %v225, 2147483648
        %v482 = vxor.u32 %v226, 2147483648
        %v483 = vxor.u32 %v227, 2147483648
        %v484 = vxor.u32 %v228, 2147483648
        %v485 = vxor.u32 %v229, 2147483648
        %v486 = vxor.u32 %v230, 2147483648
        %v487 = vxor.u32 %v231, 2147483648
        %v488 = vxor.u32 %v232, 2147483648
        %v489 = vxor.u32 %v233, 2147483648
        %v490 = vxor.u32 %v234, 2147483648
        %v491 = vxor.u32 %v235, 2147483648
        %v492 = vxor.u32 %v236, 2147483648
        %v493 = vxor.u32 %v237, 2147483648
        %v494 = vxor.u32 %v238, 2147483648
        %v495 = vxor.u32 %v239, 2147483648
        %v496 = vxor.u32 %v240, 2147483648
        %v497 = vxor.u32 %v241, 2147483648
        %v498 = vxor.u32 %v242, 2147483648
        %v499 = vxor.u32 %v243, 2147483648
        %v500 = vxor.u32 %v244, 2147483648
        %v501 = vxor.u32 %v245, 2147483648
        %v502 = vxor.u32 %v246, 2147483648
        %v503 = vxor.u32 %v247, 2147483648
        %v504 = vxor.u32 %v248, 2147483648
        %v505 = vxor.u32 %v249, 2147483648
        %v506 = vxor.u32 %v250, 2147483648
        %v507 = vxor.u32 %v251, 2147483648
        %v508 = vxor.u32 %v252, 2147483648
        %v509 = vxor.u32 %v253, 2147483648
        %v510 = vxor.u32 %v254, 2147483648
        %v511 = vxor.u32 %v255, 2147483648
        %v512 = vxor.u32 %v256, 2147483648
        %v513 = vxor.u32 %v257, 2147483648
        %v514 = vxor.u32 %v258, 2147483648
        %v515 = vxor.u32 %v259, 2147483648
        %v516 = vxor.u32 %v260, 2147483648
        %v517 = vxor.u32 %v261, 2147483648
        %v518 = vxor.u32 %v262, 2147483648
        %v519 = vxor.u32 %v263, 2147483648
        %v520 = vxor.u32 %v264, 2147483648
        %v521 = vxor.u32 %v265, 2147483648
        %v522 = vxor.u32 %v266, 2147483648
        %v523 = vxor.u32 %v267, 2147483648
        %v524 = vxor.u32 %v268, 2147483648
        %v525 = vxor.u32 %v269, 2147483648
        %v526 = vxor.u32 %v270, 2147483648
        %v527 = vxor.u32 %v271, 2147483648
        %v528 = vxor.u32 %v272, 2147483648
        %v529 = vxor.u32 %v273, 2147483648
        %v530 = vxor.u32 %v274, 2147483648
        %v531 = vxor.u32 %v275, 2147483648
        %v532 = vxor.u32 %v276, 2147483648
        %v533 = vxor.u32 %v277, 2147483648
        %v534 = vxor.u32 %v278, 2147483648
        %v535 = vxor.u32 %v279, 2147483648
        %v536 = vxor.u32 %v280, 2147483648
        %v537 = vxor.u32 %v281, 2147483648
        %v538 = vxor.u32 %v282, 2147483648
        %v539 = vxor.u32 %v283, 2147483648
        %v540 = vxor.u32 %v284, 2147483648
        %v541 = vxor.u32 %v285, 2147483648
        %v542 = vxor.u32 %v286, 2147483648
        %v543 = vxor.u32 %v287, 2147483648
        %v544 = vxor.u32 %v288, 2147483648
        %v545 = vxor.u32 %v289, 2147483648
        %v546 = vxor.u32 %v290, 2147483648
        %v547 = vxor.u32 %v291, 2147483648
        %v548 = vxor.u32 %v292, 2147483648
        %v549 = vxor.u32 %v293, 2147483648
        %v550 = vxor.u32 %v294, 2147483648
        %v551 = vxor.u32 %v295, 2147483648
        %v552 = vxor.u32 %v296, 2147483648
        %v553 = vxor.u32 %v297, 2147483648
        %v554 = vxor.u32 %v298, 2147483648
        %v555 = vxor.u32 %v299, 2147483648
        %v556 = vxor.u32 %v300, 2147483648
        %v557 = vxor.u32 %v301, 2147483648
        %v558 = vxor.u32 %v302, 2147483648
        %v559 = vxor.u32 %v303, 2147483648
        %v560 = vxor.u32 %v304, 2147483648
        %v561 = vxor.u32 %v305, 2147483648
        %v562 = vxor.u32 %v306, 2147483648
        %v563 = vxor.u32 %v307, 2147483648
        %v564 = vxor.u32 %v308, 2147483648
        %v565 = vxor.u32 %v309, 2147483648
        %v566 = vxor.u32 %v310, 2147483648
        %v567 = vxor.u32 %v311, 2147483648
        %v568 = vxor.u32 %v312, 2147483648
        %v569 = vxor.u32 %v313, 2147483648
        %v570 = vxor.u32 %v314, 2147483648
        %v571 = vxor.u32 %v315, 2147483648
        %v572 = vxor.u32 %v316, 2147483648
        %v573 = vxor.u32 %v317, 2147483648
        %v574 = vxor.u32 %v318, 2147483648
        %v575 = vxor.u32 %v319, 2147483648
        %v576 = vxor.u32 %v320, 2147483648
        %v577 = vxor.u32 %v321, 2147483648
        %v578 = vxor.u32 %v322, 2147483648
        %v579 = vxor.u32 %v323, 2147483648
        %v580 = vxor.u32 %v324, 2147483648
        %v581 = vxor.u32 %v325, 2147483648
        %v582 = vxor.u32 %v326, 2147483648
        %v583 = vxor.u32 %v327, 2147483648
        %v584 = vxor.u32 %v328, 2147483648
        %v585 = vxor.u32 %v329, 2147483648
        %v586 = vxor.u32 %v330, 2147483648
        %v587 = vxor.u32 %v331, 2147483648
        %v588 = vxor.u32 %v332, 2147483648
        %v589 = vxor.u32 %v333, 2147483648
        %v590 = vxor.u32 %v334, 2147483648
        %v591 = vxor.u32 %v335, 2147483648
        %v592 = vxor.u32 %v336, 2147483648
        %v593 = vxor.u32 %v337, 2147483648
        %v594 = vxor.u32 %v338, 2147483648
        %v595 = vxor.u32 %v339, 2147483648
        %v596 = vxor.u32 %v340, 2147483648
        %v597 = vxor.u32 %v341, 2147483648
        %v598 = vxor.u32 %v342, 2147483648
        %v599 = vxor.u32 %v343, 2147483648
        %v600 = vxor.u32 %v344, 2147483648
        %v601 = vxor.u32 %v345, 2147483648
        %v602 = vxor.u32 %v346, 2147483648
        %v603 = vxor.u32 %v347, 2147483648
        %v604 = vxor.u32 %v348, 2147483648
        %v605 = vxor.u32 %v349, 2147483648
        %v606 = vxor.u32 %v350, 2147483648
        %v607 = vxor.u32 %v351, 2147483648
        %v608 = vxor.u32 %v352, 2147483648
        %v609 = vxor.u32 %v353, 2147483648
        %v610 = vxor.u32 %v354, 2147483648
        %v611 = vxor.u32 %v355, 2147483648
        %v612 = vxor.u32 %v356, 2147483648
        %v613 = vxor.u32 %v357, 2147483648
        %v614 = vxor.u32 %v358, 2147483648
        %v615 = vxor.u32 %v359, 2147483648
        %v616 = vxor.u32 %v360, 2147483648
        %v617 = vxor.u32 %v361, 2147483648
        %v618 = vxor.u32 %v362, 2147483648
        %v619 = vxor.u32 %v363, 2147483648
        %v620 = vxor.u32 %v364, 2147483648
        %v621 = vxor.u32 %v365, 2147483648
        %v622 = vxor.u32 %v366, 2147483648
        %v623 = vxor.u32 %v367, 2147483648
        %v624 = vxor.u32 %v368, 2147483648
        %v625 = vxor.u32 %v369, 2147483648
        %v626 = vxor.u32 %v370, 2147483648
        %v627 = vxor.u32 %v371, 2147483648
        %v628 = vxor.u32 %v372, 2147483648
        %v629 = vxor.u32 %v373, 2147483648
        %v630 = vxor.u32 %v374, 2147483648
        %v631 = vxor.u32 %v375, 2147483648
        %v632 = vxor.u32 %v376, 2147483648
        %v633 = vxor.u32 %v377, 2147483648
        %v634 = vxor.u32 %v378, 2147483648
        %v635 = vxor.u32 %v379, 2147483648
        %v636 = vxor.u32 %v380, 2147483648
        %v637 = vxor.u32 %v381, 2147483648
        %v638 = vxor.u32 %v382, 2147483648
        %v639 = vxor.u32 %v383, 2147483648
        %v640 = vxor.u32 %v384, 2147483648
        %v641 = vxor.u32 %v385, 2147483648
        %v642 = vxor.u32 %v386, 2147483648
        %v643 = vxor.u32 %v387, 2147483648
        %v644 = vxor.u32 %v388, 2147483648
        %v645 = vxor.u32 %v389, 2147483648
        %v646 = vxor.u32 %v390, 2147483648
        %v647 = vxor.u32 %v391, 2147483648
        %v648 = vxor.u32 %v392, 2147483648
        %v649 = vxor.u32 %v393, 2147483648
        %v650 = vxor.u32 %v394, 2147483648
        %v651 = vxor.u32 %v395, 2147483648
        %v652 = vxor.u32 %v396, 2147483648
        %v653 = vxor.u32 %v397, 2147483648
        %v654 = vxor.u32 %v398, 2147483648
        %v655 = vxor.u32 %v399, 2147483648
        %v656 = vxor.u32 %v400, 2147483648
        %v657 = vxor.u32 %v401, 2147483648
        %v658 = vxor.u32 %v402, 2147483648
        %v659 = vxor.u32 %v403, 2147483648
        %v660 = vxor.u32 %v404, 2147483648
        %v661 = vxor.u32 %v405, 2147483648
        %v662 = vxor.u32 %v406, 2147483648
        %v663 = vmul.f32 %v407, 1.442695
        %v664 = vpow.pop %v663
        %v665 = vmul.f32 %v408, 1.442695
        %v666 = vpow.pop %v665
        %v667 = vmul.f32 %v409, 1.442695
        %v668 = vpow.pop %v667
        %v669 = vmul.f32 %v410, 1.442695
        %v670 = vpow.pop %v669
        %v671 = vmul.f32 %v411, 1.442695
        %v672 = vpow.pop %v671
        %v673 = vmul.f32 %v412, 1.442695
        %v674 = vpow.pop %v673
        %v675 = vmul.f32 %v413, 1.442695
        %v676 = vpow.pop %v675
        %v677 = vmul.f32 %v414, 1.442695
        %v678 = vpow.pop %v677
        %v679 = vmul.f32 %v415, 1.442695
        %v680 = vpow.pop %v679
        %v681 = vmul.f32 %v416, 1.442695
        %v682 = vpow.pop %v681
        %v683 = vmul.f32 %v417, 1.442695
        %v684 = vpow.pop %v683
        %v685 = vmul.f32 %v418, 1.442695
        %v686 = vpow.pop %v685
        %v687 = vmul.f32 %v419, 1.442695
        %v688 = vpow.pop %v687
        %v689 = vmul.f32 %v420, 1.442695
        %v690 = vpow.pop %v689
        %v691 = vmul.f32 %v421, 1.442695
        %v692 = vpow.pop %v691
        %v693 = vmul.f32 %v422, 1.442695
        %v694 = vpow.pop %v693
        %v695 = vmul.f32 %v423, 1.442695
        %v696 = vpow.pop %v695
        %v697 = vmul.f32 %v424, 1.442695
        %v698 = vpow.pop %v697
        %v699 = vmul.f32 %v425, 1.442695
        %v700 = vpow.pop %v699
        %v701 = vmul.f32 %v426, 1.442695
        %v702 = vpow.pop %v701
        %v703 = vmul.f32 %v427, 1.442695
        %v704 = vpow.pop %v703
        %v705 = vmul.f32 %v428, 1.442695
        %v706 = vpow.pop %v705
        %v707 = vmul.f32 %v429, 1.442695
        %v708 = vpow.pop %v707
        %v709 = vmul.f32 %v430, 1.442695
        %v710 = vpow.pop %v709
        %v711 = vmul.f32 %v431, 1.442695
        %v712 = vpow.pop %v711
        %v713 = vmul.f32 %v432, 1.442695
        %v714 = vpow.pop %v713
        %v715 = vmul.f32 %v433, 1.442695
        %v716 = vpow.pop %v715
        %v717 = vmul.f32 %v434, 1.442695
        %v718 = vpow.pop %v717
        %v719 = vmul.f32 %v435, 1.442695
        %v720 = vpow.pop %v719
        %v721 = vmul.f32 %v436, 1.442695
        %v722 = vpow.pop %v721
        %v723 = vmul.f32 %v437, 1.442695
        %v724 = vpow.pop %v723
        %v725 = vmul.f32 %v438, 1.442695
        %v726 = vpow.pop %v725
        %v727 = vmul.f32 %v439, 1.442695
        %v728 = vpow.pop %v727
        %v729 = vmul.f32 %v440, 1.442695
        %v730 = vpow.pop %v729
        %v731 = vmul.f32 %v441, 1.442695
        %v732 = vpow.pop %v731
        %v733 = vmul.f32 %v442, 1.442695
        %v734 = vpow.pop %v733
        %v735 = vmul.f32 %v443, 1.442695
        %v736 = vpow.pop %v735
        %v737 = vmul.f32 %v444, 1.442695
        %v738 = vpow.pop %v737
        %v739 = vmul.f32 %v445, 1.442695
        %v740 = vpow.pop %v739
        %v741 = vmul.f32 %v446, 1.442695
        %v742 = vpow.pop %v741
        %v743 = vmul.f32 %v447, 1.442695
        %v744 = vpow.pop %v743
        %v745 = vmul.f32 %v448, 1.442695
        %v746 = vpow.pop %v745
        %v747 = vmul.f32 %v449, 1.442695
        %v748 = vpow.pop %v747
        %v749 = vmul.f32 %v450, 1.442695
        %v750 = vpow.pop %v749
        %v751 = vmul.f32 %v451, 1.442695
        %v752 = vpow.pop %v751
        %v753 = vmul.f32 %v452, 1.442695
        %v754 = vpow.pop %v753
        %v755 = vmul.f32 %v453, 1.442695
        %v756 = vpow.pop %v755
        %v757 = vmul.f32 %v454, 1.442695
        %v758 = vpow.pop %v757
        %v759 = vmul.f32 %v455, 1.442695
        %v760 = vpow.pop %v759
        %v761 = vmul.f32 %v456, 1.442695
        %v762 = vpow.pop %v761
        %v763 = vmul.f32 %v457, 1.442695
        %v764 = vpow.pop %v763
        %v765 = vmul.f32 %v458, 1.442695
        %v766 = vpow.pop %v765
        %v767 = vmul.f32 %v459, 1.442695
        %v768 = vpow.pop %v767
        %v769 = vmul.f32 %v460, 1.442695
        %v770 = vpow.pop %v769
        %v771 = vmul.f32 %v461, 1.442695
        %v772 = vpow.pop %v771
        %v773 = vmul.f32 %v462, 1.442695
        %v774 = vpow.pop %v773
        %v775 = vmul.f32 %v463, 1.442695
        %v776 = vpow.pop %v775
        %v777 = vmul.f32 %v464, 1.442695
        %v778 = vpow.pop %v777
        %v779 = vmul.f32 %v465, 1.442695
        %v780 = vpow.pop %v779
        %v781 = vmul.f32 %v466, 1.442695
        %v782 = vpow.pop %v781
        %v783 = vmul.f32 %v467, 1.442695
        %v784 = vpow.pop %v783
        %v785 = vmul.f32 %v468, 1.442695
        %v786 = vpow.pop %v785
        %v787 = vmul.f32 %v469, 1.442695
        %v788 = vpow.pop %v787
        %v789 = vmul.f32 %v470, 1.442695
        %v790 = vpow.pop %v789
        %v791 = vmul.f32 %v471, 1.442695
        %v792 = vpow.pop %v791
        %v793 = vmul.f32 %v472, 1.442695
        %v794 = vpow.pop %v793
        %v795 = vmul.f32 %v473, 1.442695
        %v796 = vpow.pop %v795
        %v797 = vmul.f32 %v474, 1.442695
        %v798 = vpow.pop %v797
        %v799 = vmul.f32 %v475, 1.442695
        %v800 = vpow.pop %v799
        %v801 = vmul.f32 %v476, 1.442695
        %v802 = vpow.pop %v801
        %v803 = vmul.f32 %v477, 1.442695
        %v804 = vpow.pop %v803
        %v805 = vmul.f32 %v478, 1.442695
        %v806 = vpow.pop %v805
        %v807 = vmul.f32 %v479, 1.442695
        %v808 = vpow.pop %v807
        %v809 = vmul.f32 %v480, 1.442695
        %v810 = vpow.pop %v809
        %v811 = vmul.f32 %v481, 1.442695
        %v812 = vpow.pop %v811
        %v813 = vmul.f32 %v482, 1.442695
        %v814 = vpow.pop %v813
        %v815 = vmul.f32 %v483, 1.442695
        %v816 = vpow.pop %v815
        %v817 = vmul.f32 %v484, 1.442695
        %v818 = vpow.pop %v817
        %v819 = vmul.f32 %v485, 1.442695
        %v820 = vpow.pop %v819
        %v821 = vmul.f32 %v486, 1.442695
        %v822 = vpow.pop %v821
        %v823 = vmul.f32 %v487, 1.442695
        %v824 = vpow.pop %v823
        %v825 = vmul.f32 %v488, 1.442695
        %v826 = vpow.pop %v825
        %v827 = vmul.f32 %v489, 1.442695
        %v828 = vpow.pop %v827
        %v829 = vmul.f32 %v490, 1.442695
        %v830 = vpow.pop %v829
        %v831 = vmul.f32 %v491, 1.442695
        %v832 = vpow.pop %v831
        %v833 = vmul.f32 %v492, 1.442695
        %v834 = vpow.pop %v833
        %v835 = vmul.f32 %v493, 1.442695
        %v836 = vpow.pop %v835
        %v837 = vmul.f32 %v494, 1.442695
        %v838 = vpow.pop %v837
        %v839 = vmul.f32 %v495, 1.442695
        %v840 = vpow.pop %v839
        %v841 = vmul.f32 %v496, 1.442695
        %v842 = vpow.pop %v841
        %v843 = vmul.f32 %v497, 1.442695
        %v844 = vpow.pop %v843
        %v845 = vmul.f32 %v498, 1.442695
        %v846 = vpow.pop %v845
        %v847 = vmul.f32 %v499, 1.442695
        %v848 = vpow.pop %v847
        %v849 = vmul.f32 %v500, 1.442695
        %v850 = vpow.pop %v849
        %v851 = vmul.f32 %v501, 1.442695
        %v852 = vpow.pop %v851
        %v853 = vmul.f32 %v502, 1.442695
        %v854 = vpow.pop %v853
        %v855 = vmul.f32 %v503, 1.442695
        %v856 = vpow.pop %v855
        %v857 = vmul.f32 %v504, 1.442695
        %v858 = vpow.pop %v857
        %v859 = vmul.f32 %v505, 1.442695
        %v860 = vpow.pop %v859
        %v861 = vmul.f32 %v506, 1.442695
        %v862 = vpow.pop %v861
        %v863 = vmul.f32 %v507, 1.442695
        %v864 = vpow.pop %v863
        %v865 = vmul.f32 %v508, 1.442695
        %v866 = vpow.pop %v865
        %v867 = vmul.f32 %v509, 1.442695
        %v868 = vpow.pop %v867
        %v869 = vmul.f32 %v510, 1.442695
        %v870 = vpow.pop %v869
        %v871 = vmul.f32 %v511, 1.442695
        %v872 = vpow.pop %v871
        %v873 = vmul.f32 %v512, 1.442695
        %v874 = vpow.pop %v873
        %v875 = vmul.f32 %v513, 1.442695
        %v876 = vpow.pop %v875
        %v877 = vmul.f32 %v514, 1.442695
        %v878 = vpow.pop %v877
        %v879 = vmul.f32 %v515, 1.442695
        %v880 = vpow.pop %v879
        %v881 = vmul.f32 %v516, 1.442695
        %v882 = vpow.pop %v881
        %v883 = vmul.f32 %v517, 1.442695
        %v884 = vpow.pop %v883
        %v885 = vmul.f32 %v518, 1.442695
        %v886 = vpow.pop %v885
        %v887 = vmul.f32 %v519, 1.442695
        %v888 = vpow.pop %v887
        %v889 = vmul.f32 %v520, 1.442695
        %v890 = vpow.pop %v889
        %v891 = vmul.f32 %v521, 1.442695
        %v892 = vpow.pop %v891
        %v893 = vmul.f32 %v522, 1.442695
        %v894 = vpow.pop %v893
        %v895 = vmul.f32 %v523, 1.442695
        %v896 = vpow.pop %v895
        %v897 = vmul.f32 %v524, 1.442695
        %v898 = vpow.pop %v897
        %v899 = vmul.f32 %v525, 1.442695
        %v900 = vpow.pop %v899
        %v901 = vmul.f32 %v526, 1.442695
        %v902 = vpow.pop %v901
        %v903 = vmul.f32 %v527, 1.442695
        %v904 = vpow.pop %v903
        %v905 = vmul.f32 %v528, 1.442695
        %v906 = vpow.pop %v905
        %v907 = vmul.f32 %v529, 1.442695
        %v908 = vpow.pop %v907
        %v909 = vmul.f32 %v530, 1.442695
        %v910 = vpow.pop %v909
        %v911 = vmul.f32 %v531, 1.442695
        %v912 = vpow.pop %v911
        %v913 = vmul.f32 %v532, 1.442695
        %v914 = vpow.pop %v913
        %v915 = vmul.f32 %v533, 1.442695
        %v916 = vpow.pop %v915
        %v917 = vmul.f32 %v534, 1.442695
        %v918 = vpow.pop %v917
        %v919 = vmul.f32 %v535, 1.442695
        %v920 = vpow.pop %v919
        %v921 = vmul.f32 %v536, 1.442695
        %v922 = vpow.pop %v921
        %v923 = vmul.f32 %v537, 1.442695
        %v924 = vpow.pop %v923
        %v925 = vmul.f32 %v538, 1.442695
        %v926 = vpow.pop %v925
        %v927 = vmul.f32 %v539, 1.442695
        %v928 = vpow.pop %v927
        %v929 = vmul.f32 %v540, 1.442695
        %v930 = vpow.pop %v929
        %v931 = vmul.f32 %v541, 1.442695
        %v932 = vpow.pop %v931
        %v933 = vmul.f32 %v542, 1.442695
        %v934 = vpow.pop %v933
        %v935 = vmul.f32 %v543, 1.442695
        %v936 = vpow.pop %v935
        %v937 = vmul.f32 %v544, 1.442695
        %v938 = vpow.pop %v937
        %v939 = vmul.f32 %v545, 1.442695
        %v940 = vpow.pop %v939
        %v941 = vmul.f32 %v546, 1.442695
        %v942 = vpow.pop %v941
        %v943 = vmul.f32 %v547, 1.442695
        %v944 = vpow.pop %v943
        %v945 = vmul.f32 %v548, 1.442695
        %v946 = vpow.pop %v945
        %v947 = vmul.f32 %v549, 1.442695
        %v948 = vpow.pop %v947
        %v949 = vmul.f32 %v550, 1.442695
        %v950 = vpow.pop %v949
        %v951 = vmul.f32 %v551, 1.442695
        %v952 = vpow.pop %v951
        %v953 = vmul.f32 %v552, 1.442695
        %v954 = vpow.pop %v953
        %v955 = vmul.f32 %v553, 1.442695
        %v956 = vpow.pop %v955
        %v957 = vmul.f32 %v554, 1.442695
        %v958 = vpow.pop %v957
        %v959 = vmul.f32 %v555, 1.442695
        %v960 = vpow.pop %v959
        %v961 = vmul.f32 %v556, 1.442695
        %v962 = vpow.pop %v961
        %v963 = vmul.f32 %v557, 1.442695
        %v964 = vpow.pop %v963
        %v965 = vmul.f32 %v558, 1.442695
        %v966 = vpow.pop %v965
        %v967 = vmul.f32 %v559, 1.442695
        %v968 = vpow.pop %v967
        %v969 = vmul.f32 %v560, 1.442695
        %v970 = vpow.pop %v969
        %v971 = vmul.f32 %v561, 1.442695
        %v972 = vpow.pop %v971
        %v973 = vmul.f32 %v562, 1.442695
        %v974 = vpow.pop %v973
        %v975 = vmul.f32 %v563, 1.442695
        %v976 = vpow.pop %v975
        %v977 = vmul.f32 %v564, 1.442695
        %v978 = vpow.pop %v977
        %v979 = vmul.f32 %v565, 1.442695
        %v980 = vpow.pop %v979
        %v981 = vmul.f32 %v566, 1.442695
        %v982 = vpow.pop %v981
        %v983 = vmul.f32 %v567, 1.442695
        %v984 = vpow.pop %v983
        %v985 = vmul.f32 %v568, 1.442695
        %v986 = vpow.pop %v985
        %v987 = vmul.f32 %v569, 1.442695
        %v988 = vpow.pop %v987
        %v989 = vmul.f32 %v570, 1.442695
        %v990 = vpow.pop %v989
        %v991 = vmul.f32 %v571, 1.442695
        %v992 = vpow.pop %v991
        %v993 = vmul.f32 %v572, 1.442695
        %v994 = vpow.pop %v993
        %v995 = vmul.f32 %v573, 1.442695
        %v996 = vpow.pop %v995
        %v997 = vmul.f32 %v574, 1.442695
        %v998 = vpow.pop %v997
        %v999 = vmul.f32 %v575, 1.442695
        %v1000 = vpow.pop %v999
        %v1001 = vmul.f32 %v576, 1.442695
        %v1002 = vpow.pop %v1001
        %v1003 = vmul.f32 %v577, 1.442695
        %v1004 = vpow.pop %v1003
        %v1005 = vmul.f32 %v578, 1.442695
        %v1006 = vpow.pop %v1005
        %v1007 = vmul.f32 %v579, 1.442695
        %v1008 = vpow.pop %v1007
        %v1009 = vmul.f32 %v580, 1.442695
        %v1010 = vpow.pop %v1009
        %v1011 = vmul.f32 %v581, 1.442695
        %v1012 = vpow.pop %v1011
        %v1013 = vmul.f32 %v582, 1.442695
        %v1014 = vpow.pop %v1013
        %v1015 = vmul.f32 %v583, 1.442695
        %v1016 = vpow.pop %v1015
        %v1017 = vmul.f32 %v584, 1.442695
        %v1018 = vpow.pop %v1017
        %v1019 = vmul.f32 %v585, 1.442695
        %v1020 = vpow.pop %v1019
        %v1021 = vmul.f32 %v586, 1.442695
        %v1022 = vpow.pop %v1021
        %v1023 = vmul.f32 %v587, 1.442695
        %v1024 = vpow.pop %v1023
        %v1025 = vmul.f32 %v588, 1.442695
        %v1026 = vpow.pop %v1025
        %v1027 = vmul.f32 %v589, 1.442695
        %v1028 = vpow.pop %v1027
        %v1029 = vmul.f32 %v590, 1.442695
        %v1030 = vpow.pop %v1029
        %v1031 = vmul.f32 %v591, 1.442695
        %v1032 = vpow.pop %v1031
        %v1033 = vmul.f32 %v592, 1.442695
        %v1034 = vpow.pop %v1033
        %v1035 = vmul.f32 %v593, 1.442695
        %v1036 = vpow.pop %v1035
        %v1037 = vmul.f32 %v594, 1.442695
        %v1038 = vpow.pop %v1037
        %v1039 = vmul.f32 %v595, 1.442695
        %v1040 = vpow.pop %v1039
        %v1041 = vmul.f32 %v596, 1.442695
        %v1042 = vpow.pop %v1041
        %v1043 = vmul.f32 %v597, 1.442695
        %v1044 = vpow.pop %v1043
        %v1045 = vmul.f32 %v598, 1.442695
        %v1046 = vpow.pop %v1045
        %v1047 = vmul.f32 %v599, 1.442695
        %v1048 = vpow.pop %v1047
        %v1049 = vmul.f32 %v600, 1.442695
        %v1050 = vpow.pop %v1049
        %v1051 = vmul.f32 %v601, 1.442695
        %v1052 = vpow.pop %v1051
        %v1053 = vmul.f32 %v602, 1.442695
        %v1054 = vpow.pop %v1053
        %v1055 = vmul.f32 %v603, 1.442695
        %v1056 = vpow.pop %v1055
        %v1057 = vmul.f32 %v604, 1.442695
        %v1058 = vpow.pop %v1057
        %v1059 = vmul.f32 %v605, 1.442695
        %v1060 = vpow.pop %v1059
        %v1061 = vmul.f32 %v606, 1.442695
        %v1062 = vpow.pop %v1061
        %v1063 = vmul.f32 %v607, 1.442695
        %v1064 = vpow.pop %v1063
        %v1065 = vmul.f32 %v608, 1.442695
        %v1066 = vpow.pop %v1065
        %v1067 = vmul.f32 %v609, 1.442695
        %v1068 = vpow.pop %v1067
        %v1069 = vmul.f32 %v610, 1.442695
        %v1070 = vpow.pop %v1069
        %v1071 = vmul.f32 %v611, 1.442695
        %v1072 = vpow.pop %v1071
        %v1073 = vmul.f32 %v612, 1.442695
        %v1074 = vpow.pop %v1073
        %v1075 = vmul.f32 %v613, 1.442695
        %v1076 = vpow.pop %v1075
        %v1077 = vmul.f32 %v614, 1.442695
        %v1078 = vpow.pop %v1077
        %v1079 = vmul.f32 %v615, 1.442695
        %v1080 = vpow.pop %v1079
        %v1081 = vmul.f32 %v616, 1.442695
        %v1082 = vpow.pop %v1081
        %v1083 = vmul.f32 %v617, 1.442695
        %v1084 = vpow.pop %v1083
        %v1085 = vmul.f32 %v618, 1.442695
        %v1086 = vpow.pop %v1085
        %v1087 = vmul.f32 %v619, 1.442695
        %v1088 = vpow.pop %v1087
        %v1089 = vmul.f32 %v620, 1.442695
        %v1090 = vpow.pop %v1089
        %v1091 = vmul.f32 %v621, 1.442695
        %v1092 = vpow.pop %v1091
        %v1093 = vmul.f32 %v622, 1.442695
        %v1094 = vpow.pop %v1093
        %v1095 = vmul.f32 %v623, 1.442695
        %v1096 = vpow.pop %v1095
        %v1097 = vmul.f32 %v624, 1.442695
        %v1098 = vpow.pop %v1097
        %v1099 = vmul.f32 %v625, 1.442695
        %v1100 = vpow.pop %v1099
        %v1101 = vmul.f32 %v626, 1.442695
        %v1102 = vpow.pop %v1101
        %v1103 = vmul.f32 %v627, 1.442695
        %v1104 = vpow.pop %v1103
        %v1105 = vmul.f32 %v628, 1.442695
        %v1106 = vpow.pop %v1105
        %v1107 = vmul.f32 %v629, 1.442695
        %v1108 = vpow.pop %v1107
        %v1109 = vmul.f32 %v630, 1.442695
        %v1110 = vpow.pop %v1109
        %v1111 = vmul.f32 %v631, 1.442695
        %v1112 = vpow.pop %v1111
        %v1113 = vmul.f32 %v632, 1.442695
        %v1114 = vpow.pop %v1113
        %v1115 = vmul.f32 %v633, 1.442695
        %v1116 = vpow.pop %v1115
        %v1117 = vmul.f32 %v634, 1.442695
        %v1118 = vpow.pop %v1117
        %v1119 = vmul.f32 %v635, 1.442695
        %v1120 = vpow.pop %v1119
        %v1121 = vmul.f32 %v636, 1.442695
        %v1122 = vpow.pop %v1121
        %v1123 = vmul.f32 %v637, 1.442695
        %v1124 = vpow.pop %v1123
        %v1125 = vmul.f32 %v638, 1.442695
        %v1126 = vpow.pop %v1125
        %v1127 = vmul.f32 %v639, 1.442695
        %v1128 = vpow.pop %v1127
        %v1129 = vmul.f32 %v640, 1.442695
        %v1130 = vpow.pop %v1129
        %v1131 = vmul.f32 %v641, 1.442695
        %v1132 = vpow.pop %v1131
        %v1133 = vmul.f32 %v642, 1.442695
        %v1134 = vpow.pop %v1133
        %v1135 = vmul.f32 %v643, 1.442695
        %v1136 = vpow.pop %v1135
        %v1137 = vmul.f32 %v644, 1.442695
        %v1138 = vpow.pop %v1137
        %v1139 = vmul.f32 %v645, 1.442695
        %v1140 = vpow.pop %v1139
        %v1141 = vmul.f32 %v646, 1.442695
        %v1142 = vpow.pop %v1141
        %v1143 = vmul.f32 %v647, 1.442695
        %v1144 = vpow.pop %v1143
        %v1145 = vmul.f32 %v648, 1.442695
        %v1146 = vpow.pop %v1145
        %v1147 = vmul.f32 %v649, 1.442695
        %v1148 = vpow.pop %v1147
        %v1149 = vmul.f32 %v650, 1.442695
        %v1150 = vpow.pop %v1149
        %v1151 = vmul.f32 %v651, 1.442695
        %v1152 = vpow.pop %v1151
        %v1153 = vmul.f32 %v652, 1.442695
        %v1154 = vpow.pop %v1153
        %v1155 = vmul.f32 %v653, 1.442695
        %v1156 = vpow.pop %v1155
        %v1157 = vmul.f32 %v654, 1.442695
        %v1158 = vpow.pop %v1157
        %v1159 = vmul.f32 %v655, 1.442695
        %v1160 = vpow.pop %v1159
        %v1161 = vmul.f32 %v656, 1.442695
        %v1162 = vpow.pop %v1161
        %v1163 = vmul.f32 %v657, 1.442695
        %v1164 = vpow.pop %v1163
        %v1165 = vmul.f32 %v658, 1.442695
        %v1166 = vpow.pop %v1165
        %v1167 = vmul.f32 %v659, 1.442695
        %v1168 = vpow.pop %v1167
        %v1169 = vmul.f32 %v660, 1.442695
        %v1170 = vpow.pop %v1169
        %v1171 = vmul.f32 %v661, 1.442695
        %v1172 = vpow.pop %v1171
        %v1173 = vmul.f32 %v662, 1.442695
        %v1174 = vpow.pop %v1173
        %v1175 = vadd.f32 %v664, 1.0
        %v1176 = vadd.f32 %v666, 1.0
        %v1177 = vadd.f32 %v668, 1.0
        %v1178 = vadd.f32 %v670, 1.0
        %v1179 = vadd.f32 %v672, 1.0
        %v1180 = vadd.f32 %v674, 1.0
        %v1181 = vadd.f32 %v676, 1.0
        %v1182 = vadd.f32 %v678, 1.0
        %v1183 = vadd.f32 %v680, 1.0
        %v1184 = vadd.f32 %v682, 1.0
        %v1185 = vadd.f32 %v684, 1.0
        %v1186 = vadd.f32 %v686, 1.0
        %v1187 = vadd.f32 %v688, 1.0
        %v1188 = vadd.f32 %v690, 1.0
        %v1189 = vadd.f32 %v692, 1.0
        %v1190 = vadd.f32 %v694, 1.0
        %v1191 = vadd.f32 %v696, 1.0
        %v1192 = vadd.f32 %v698, 1.0
        %v1193 = vadd.f32 %v700, 1.0
        %v1194 = vadd.f32 %v702, 1.0
        %v1195 = vadd.f32 %v704, 1.0
        %v1196 = vadd.f32 %v706, 1.0
        %v1197 = vadd.f32 %v708, 1.0
        %v1198 = vadd.f32 %v710, 1.0
        %v1199 = vadd.f32 %v712, 1.0
        %v1200 = vadd.f32 %v714, 1.0
        %v1201 = vadd.f32 %v716, 1.0
        %v1202 = vadd.f32 %v718, 1.0
        %v1203 = vadd.f32 %v720, 1.0
        %v1204 = vadd.f32 %v722, 1.0
        %v1205 = vadd.f32 %v724, 1.0
        %v1206 = vadd.f32 %v726, 1.0
        %v1207 = vadd.f32 %v728, 1.0
        %v1208 = vadd.f32 %v730, 1.0
        %v1209 = vadd.f32 %v732, 1.0
        %v1210 = vadd.f32 %v734, 1.0
        %v1211 = vadd.f32 %v736, 1.0
        %v1212 = vadd.f32 %v738, 1.0
        %v1213 = vadd.f32 %v740, 1.0
        %v1214 = vadd.f32 %v742, 1.0
        %v1215 = vadd.f32 %v744, 1.0
        %v1216 = vadd.f32 %v746, 1.0
        %v1217 = vadd.f32 %v748, 1.0
        %v1218 = vadd.f32 %v750, 1.0
        %v1219 = vadd.f32 %v752, 1.0
        %v1220 = vadd.f32 %v754, 1.0
        %v1221 = vadd.f32 %v756, 1.0
        %v1222 = vadd.f32 %v758, 1.0
        %v1223 = vadd.f32 %v760, 1.0
        %v1224 = vadd.f32 %v762, 1.0
        %v1225 = vadd.f32 %v764, 1.0
        %v1226 = vadd.f32 %v766, 1.0
        %v1227 = vadd.f32 %v768, 1.0
        %v1228 = vadd.f32 %v770, 1.0
        %v1229 = vadd.f32 %v772, 1.0
        %v1230 = vadd.f32 %v774, 1.0
        %v1231 = vadd.f32 %v776, 1.0
        %v1232 = vadd.f32 %v778, 1.0
        %v1233 = vadd.f32 %v780, 1.0
        %v1234 = vadd.f32 %v782, 1.0
        %v1235 = vadd.f32 %v784, 1.0
        %v1236 = vadd.f32 %v786, 1.0
        %v1237 = vadd.f32 %v788, 1.0
        %v1238 = vadd.f32 %v790, 1.0
        %v1239 = vadd.f32 %v792, 1.0
        %v1240 = vadd.f32 %v794, 1.0
        %v1241 = vadd.f32 %v796, 1.0
        %v1242 = vadd.f32 %v798, 1.0
        %v1243 = vadd.f32 %v800, 1.0
        %v1244 = vadd.f32 %v802, 1.0
        %v1245 = vadd.f32 %v804, 1.0
        %v1246 = vadd.f32 %v806, 1.0
        %v1247 = vadd.f32 %v808, 1.0
        %v1248 = vadd.f32 %v810, 1.0
        %v1249 = vadd.f32 %v812, 1.0
        %v1250 = vadd.f32 %v814, 1.0
        %v1251 = vadd.f32 %v816, 1.0
        %v1252 = vadd.f32 %v818, 1.0
        %v1253 = vadd.f32 %v820, 1.0
        %v1254 = vadd.f32 %v822, 1.0
        %v1255 = vadd.f32 %v824, 1.0
        %v1256 = vadd.f32 %v826, 1.0
        %v1257 = vadd.f32 %v828, 1.0
        %v1258 = vadd.f32 %v830, 1.0
        %v1259 = vadd.f32 %v832, 1.0
        %v1260 = vadd.f32 %v834, 1.0
        %v1261 = vadd.f32 %v836, 1.0
        %v1262 = vadd.f32 %v838, 1.0
        %v1263 = vadd.f32 %v840, 1.0
        %v1264 = vadd.f32 %v842, 1.0
        %v1265 = vadd.f32 %v844, 1.0
        %v1266 = vadd.f32 %v846, 1.0
        %v1267 = vadd.f32 %v848, 1.0
        %v1268 = vadd.f32 %v850, 1.0
        %v1269 = vadd.f32 %v852, 1.0
        %v1270 = vadd.f32 %v854, 1.0
        %v1271 = vadd.f32 %v856, 1.0
        %v1272 = vadd.f32 %v858, 1.0
        %v1273 = vadd.f32 %v860, 1.0
        %v1274 = vadd.f32 %v862, 1.0
        %v1275 = vadd.f32 %v864, 1.0
        %v1276 = vadd.f32 %v866, 1.0
        %v1277 = vadd.f32 %v868, 1.0
        %v1278 = vadd.f32 %v870, 1.0
        %v1279 = vadd.f32 %v872, 1.0
        %v1280 = vadd.f32 %v874, 1.0
        %v1281 = vadd.f32 %v876, 1.0
        %v1282 = vadd.f32 %v878, 1.0
        %v1283 = vadd.f32 %v880, 1.0
        %v1284 = vadd.f32 %v882, 1.0
        %v1285 = vadd.f32 %v884, 1.0
        %v1286 = vadd.f32 %v886, 1.0
        %v1287 = vadd.f32 %v888, 1.0
        %v1288 = vadd.f32 %v890, 1.0
        %v1289 = vadd.f32 %v892, 1.0
        %v1290 = vadd.f32 %v894, 1.0
        %v1291 = vadd.f32 %v896, 1.0
        %v1292 = vadd.f32 %v898, 1.0
        %v1293 = vadd.f32 %v900, 1.0
        %v1294 = vadd.f32 %v902, 1.0
        %v1295 = vadd.f32 %v904, 1.0
        %v1296 = vadd.f32 %v906, 1.0
        %v1297 = vadd.f32 %v908, 1.0
        %v1298 = vadd.f32 %v910, 1.0
        %v1299 = vadd.f32 %v912, 1.0
        %v1300 = vadd.f32 %v914, 1.0
        %v1301 = vadd.f32 %v916, 1.0
        %v1302 = vadd.f32 %v918, 1.0
        %v1303 = vadd.f32 %v920, 1.0
        %v1304 = vadd.f32 %v922, 1.0
        %v1305 = vadd.f32 %v924, 1.0
        %v1306 = vadd.f32 %v926, 1.0
        %v1307 = vadd.f32 %v928, 1.0
        %v1308 = vadd.f32 %v930, 1.0
        %v1309 = vadd.f32 %v932, 1.0
        %v1310 = vadd.f32 %v934, 1.0
        %v1311 = vadd.f32 %v936, 1.0
        %v1312 = vadd.f32 %v938, 1.0
        %v1313 = vadd.f32 %v940, 1.0
        %v1314 = vadd.f32 %v942, 1.0
        %v1315 = vadd.f32 %v944, 1.0
        %v1316 = vadd.f32 %v946, 1.0
        %v1317 = vadd.f32 %v948, 1.0
        %v1318 = vadd.f32 %v950, 1.0
        %v1319 = vadd.f32 %v952, 1.0
        %v1320 = vadd.f32 %v954, 1.0
        %v1321 = vadd.f32 %v956, 1.0
        %v1322 = vadd.f32 %v958, 1.0
        %v1323 = vadd.f32 %v960, 1.0
        %v1324 = vadd.f32 %v962, 1.0
        %v1325 = vadd.f32 %v964, 1.0
        %v1326 = vadd.f32 %v966, 1.0
        %v1327 = vadd.f32 %v968, 1.0
        %v1328 = vadd.f32 %v970, 1.0
        %v1329 = vadd.f32 %v972, 1.0
        %v1330 = vadd.f32 %v974, 1.0
        %v1331 = vadd.f32 %v976, 1.0
        %v1332 = vadd.f32 %v978, 1.0
        %v1333 = vadd.f32 %v980, 1.0
        %v1334 = vadd.f32 %v982, 1.0
        %v1335 = vadd.f32 %v984, 1.0
        %v1336 = vadd.f32 %v986, 1.0
        %v1337 = vadd.f32 %v988, 1.0
        %v1338 = vadd.f32 %v990, 1.0
        %v1339 = vadd.f32 %v992, 1.0
        %v1340 = vadd.f32 %v994, 1.0
        %v1341 = vadd.f32 %v996, 1.0
        %v1342 = vadd.f32 %v998, 1.0
        %v1343 = vadd.f32 %v1000, 1.0
        %v1344 = vadd.f32 %v1002, 1.0
        %v1345 = vadd.f32 %v1004, 1.0
        %v1346 = vadd.f32 %v1006, 1.0
        %v1347 = vadd.f32 %v1008, 1.0
        %v1348 = vadd.f32 %v1010, 1.0
        %v1349 = vadd.f32 %v1012, 1.0
        %v1350 = vadd.f32 %v1014, 1.0
        %v1351 = vadd.f32 %v1016, 1.0
        %v1352 = vadd.f32 %v1018, 1.0
        %v1353 = vadd.f32 %v1020, 1.0
        %v1354 = vadd.f32 %v1022, 1.0
        %v1355 = vadd.f32 %v1024, 1.0
        %v1356 = vadd.f32 %v1026, 1.0
        %v1357 = vadd.f32 %v1028, 1.0
        %v1358 = vadd.f32 %v1030, 1.0
        %v1359 = vadd.f32 %v1032, 1.0
        %v1360 = vadd.f32 %v1034, 1.0
        %v1361 = vadd.f32 %v1036, 1.0
        %v1362 = vadd.f32 %v1038, 1.0
        %v1363 = vadd.f32 %v1040, 1.0
        %v1364 = vadd.f32 %v1042, 1.0
        %v1365 = vadd.f32 %v1044, 1.0
        %v1366 = vadd.f32 %v1046, 1.0
        %v1367 = vadd.f32 %v1048, 1.0
        %v1368 = vadd.f32 %v1050, 1.0
        %v1369 = vadd.f32 %v1052, 1.0
        %v1370 = vadd.f32 %v1054, 1.0
        %v1371 = vadd.f32 %v1056, 1.0
        %v1372 = vadd.f32 %v1058, 1.0
        %v1373 = vadd.f32 %v1060, 1.0
        %v1374 = vadd.f32 %v1062, 1.0
        %v1375 = vadd.f32 %v1064, 1.0
        %v1376 = vadd.f32 %v1066, 1.0
        %v1377 = vadd.f32 %v1068, 1.0
        %v1378 = vadd.f32 %v1070, 1.0
        %v1379 = vadd.f32 %v1072, 1.0
        %v1380 = vadd.f32 %v1074, 1.0
        %v1381 = vadd.f32 %v1076, 1.0
        %v1382 = vadd.f32 %v1078, 1.0
        %v1383 = vadd.f32 %v1080, 1.0
        %v1384 = vadd.f32 %v1082, 1.0
        %v1385 = vadd.f32 %v1084, 1.0
        %v1386 = vadd.f32 %v1086, 1.0
        %v1387 = vadd.f32 %v1088, 1.0
        %v1388 = vadd.f32 %v1090, 1.0
        %v1389 = vadd.f32 %v1092, 1.0
        %v1390 = vadd.f32 %v1094, 1.0
        %v1391 = vadd.f32 %v1096, 1.0
        %v1392 = vadd.f32 %v1098, 1.0
        %v1393 = vadd.f32 %v1100, 1.0
        %v1394 = vadd.f32 %v1102, 1.0
        %v1395 = vadd.f32 %v1104, 1.0
        %v1396 = vadd.f32 %v1106, 1.0
        %v1397 = vadd.f32 %v1108, 1.0
        %v1398 = vadd.f32 %v1110, 1.0
        %v1399 = vadd.f32 %v1112, 1.0
        %v1400 = vadd.f32 %v1114, 1.0
        %v1401 = vadd.f32 %v1116, 1.0
        %v1402 = vadd.f32 %v1118, 1.0
        %v1403 = vadd.f32 %v1120, 1.0
        %v1404 = vadd.f32 %v1122, 1.0
        %v1405 = vadd.f32 %v1124, 1.0
        %v1406 = vadd.f32 %v1126, 1.0
        %v1407 = vadd.f32 %v1128, 1.0
        %v1408 = vadd.f32 %v1130, 1.0
        %v1409 = vadd.f32 %v1132, 1.0
        %v1410 = vadd.f32 %v1134, 1.0
        %v1411 = vadd.f32 %v1136, 1.0
        %v1412 = vadd.f32 %v1138, 1.0
        %v1413 = vadd.f32 %v1140, 1.0
        %v1414 = vadd.f32 %v1142, 1.0
        %v1415 = vadd.f32 %v1144, 1.0
        %v1416 = vadd.f32 %v1146, 1.0
        %v1417 = vadd.f32 %v1148, 1.0
        %v1418 = vadd.f32 %v1150, 1.0
        %v1419 = vadd.f32 %v1152, 1.0
        %v1420 = vadd.f32 %v1154, 1.0
        %v1421 = vadd.f32 %v1156, 1.0
        %v1422 = vadd.f32 %v1158, 1.0
        %v1423 = vadd.f32 %v1160, 1.0
        %v1424 = vadd.f32 %v1162, 1.0
        %v1425 = vadd.f32 %v1164, 1.0
        %v1426 = vadd.f32 %v1166, 1.0
        %v1427 = vadd.f32 %v1168, 1.0
        %v1428 = vadd.f32 %v1170, 1.0
        %v1429 = vadd.f32 %v1172, 1.0
        %v1430 = vadd.f32 %v1174, 1.0
        %v1431 = vrcp.pop %v1175
        %v1432 = vmul.f32 1.0, %v1431
        %v1433 = vrcp.pop %v1176
        %v1434 = vmul.f32 1.0, %v1433
        %v1435 = vrcp.pop %v1177
        %v1436 = vmul.f32 1.0, %v1435
        %v1437 = vrcp.pop %v1178
        %v1438 = vmul.f32 1.0, %v1437
        %v1439 = vrcp.pop %v1179
        %v1440 = vmul.f32 1.0, %v1439
        %v1441 = vrcp.pop %v1180
        %v1442 = vmul.f32 1.0, %v1441
        %v1443 = vrcp.pop %v1181
        %v1444 = vmul.f32 1.0, %v1443
        %v1445 = vrcp.pop %v1182
        %v1446 = vmul.f32 1.0, %v1445
        %v1447 = vrcp.pop %v1183
        %v1448 = vmul.f32 1.0, %v1447
        %v1449 = vrcp.pop %v1184
        %v1450 = vmul.f32 1.0, %v1449
        %v1451 = vrcp.pop %v1185
        %v1452 = vmul.f32 1.0, %v1451
        %v1453 = vrcp.pop %v1186
        %v1454 = vmul.f32 1.0, %v1453
        %v1455 = vrcp.pop %v1187
        %v1456 = vmul.f32 1.0, %v1455
        %v1457 = vrcp.pop %v1188
        %v1458 = vmul.f32 1.0, %v1457
        %v1459 = vrcp.pop %v1189
        %v1460 = vmul.f32 1.0, %v1459
        %v1461 = vrcp.pop %v1190
        %v1462 = vmul.f32 1.0, %v1461
        %v1463 = vrcp.pop %v1191
        %v1464 = vmul.f32 1.0, %v1463
        %v1465 = vrcp.pop %v1192
        %v1466 = vmul.f32 1.0, %v1465
        %v1467 = vrcp.pop %v1193
        %v1468 = vmul.f32 1.0, %v1467
        %v1469 = vrcp.pop %v1194
        %v1470 = vmul.f32 1.0, %v1469
        %v1471 = vrcp.pop %v1195
        %v1472 = vmul.f32 1.0, %v1471
        %v1473 = vrcp.pop %v1196
        %v1474 = vmul.f32 1.0, %v1473
        %v1475 = vrcp.pop %v1197
        %v1476 = vmul.f32 1.0, %v1475
        %v1477 = vrcp.pop %v1198
        %v1478 = vmul.f32 1.0, %v1477
        %v1479 = vrcp.pop %v1199
        %v1480 = vmul.f32 1.0, %v1479
        %v1481 = vrcp.pop %v1200
        %v1482 = vmul.f32 1.0, %v1481
        %v1483 = vrcp.pop %v1201
        %v1484 = vmul.f32 1.0, %v1483
        %v1485 = vrcp.pop %v1202
        %v1486 = vmul.f32 1.0, %v1485
        %v1487 = vrcp.pop %v1203
        %v1488 = vmul.f32 1.0, %v1487
        %v1489 = vrcp.pop %v1204
        %v1490 = vmul.f32 1.0, %v1489
        %v1491 = vrcp.pop %v1205
        %v1492 = vmul.f32 1.0, %v1491
        %v1493 = vrcp.pop %v1206
        %v1494 = vmul.f32 1.0, %v1493
        %v1495 = vrcp.pop %v1207
        %v1496 = vmul.f32 1.0, %v1495
        %v1497 = vrcp.pop %v1208
        %v1498 = vmul.f32 1.0, %v1497
        %v1499 = vrcp.pop %v1209
        %v1500 = vmul.f32 1.0, %v1499
        %v1501 = vrcp.pop %v1210
        %v1502 = vmul.f32 1.0, %v1501
        %v1503 = vrcp.pop %v1211
        %v1504 = vmul.f32 1.0, %v1503
        %v1505 = vrcp.pop %v1212
        %v1506 = vmul.f32 1.0, %v1505
        %v1507 = vrcp.pop %v1213
        %v1508 = vmul.f32 1.0, %v1507
        %v1509 = vrcp.pop %v1214
        %v1510 = vmul.f32 1.0, %v1509
        %v1511 = vrcp.pop %v1215
        %v1512 = vmul.f32 1.0, %v1511
        %v1513 = vrcp.pop %v1216
        %v1514 = vmul.f32 1.0, %v1513
        %v1515 = vrcp.pop %v1217
        %v1516 = vmul.f32 1.0, %v1515
        %v1517 = vrcp.pop %v1218
        %v1518 = vmul.f32 1.0, %v1517
        %v1519 = vrcp.pop %v1219
        %v1520 = vmul.f32 1.0, %v1519
        %v1521 = vrcp.pop %v1220
        %v1522 = vmul.f32 1.0, %v1521
        %v1523 = vrcp.pop %v1221
        %v1524 = vmul.f32 1.0, %v1523
        %v1525 = vrcp.pop %v1222
        %v1526 = vmul.f32 1.0, %v1525
        %v1527 = vrcp.pop %v1223
        %v1528 = vmul.f32 1.0, %v1527
        %v1529 = vrcp.pop %v1224
        %v1530 = vmul.f32 1.0, %v1529
        %v1531 = vrcp.pop %v1225
        %v1532 = vmul.f32 1.0, %v1531
        %v1533 = vrcp.pop %v1226
        %v1534 = vmul.f32 1.0, %v1533
        %v1535 = vrcp.pop %v1227
        %v1536 = vmul.f32 1.0, %v1535
        %v1537 = vrcp.pop %v1228
        %v1538 = vmul.f32 1.0, %v1537
        %v1539 = vrcp.pop %v1229
        %v1540 = vmul.f32 1.0, %v1539
        %v1541 = vrcp.pop %v1230
        %v1542 = vmul.f32 1.0, %v1541
        %v1543 = vrcp.pop %v1231
        %v1544 = vmul.f32 1.0, %v1543
        %v1545 = vrcp.pop %v1232
        %v1546 = vmul.f32 1.0, %v1545
        %v1547 = vrcp.pop %v1233
        %v1548 = vmul.f32 1.0, %v1547
        %v1549 = vrcp.pop %v1234
        %v1550 = vmul.f32 1.0, %v1549
        %v1551 = vrcp.pop %v1235
        %v1552 = vmul.f32 1.0, %v1551
        %v1553 = vrcp.pop %v1236
        %v1554 = vmul.f32 1.0, %v1553
        %v1555 = vrcp.pop %v1237
        %v1556 = vmul.f32 1.0, %v1555
        %v1557 = vrcp.pop %v1238
        %v1558 = vmul.f32 1.0, %v1557
        %v1559 = vrcp.pop %v1239
        %v1560 = vmul.f32 1.0, %v1559
        %v1561 = vrcp.pop %v1240
        %v1562 = vmul.f32 1.0, %v1561
        %v1563 = vrcp.pop %v1241
        %v1564 = vmul.f32 1.0, %v1563
        %v1565 = vrcp.pop %v1242
        %v1566 = vmul.f32 1.0, %v1565
        %v1567 = vrcp.pop %v1243
        %v1568 = vmul.f32 1.0, %v1567
        %v1569 = vrcp.pop %v1244
        %v1570 = vmul.f32 1.0, %v1569
        %v1571 = vrcp.pop %v1245
        %v1572 = vmul.f32 1.0, %v1571
        %v1573 = vrcp.pop %v1246
        %v1574 = vmul.f32 1.0, %v1573
        %v1575 = vrcp.pop %v1247
        %v1576 = vmul.f32 1.0, %v1575
        %v1577 = vrcp.pop %v1248
        %v1578 = vmul.f32 1.0, %v1577
        %v1579 = vrcp.pop %v1249
        %v1580 = vmul.f32 1.0, %v1579
        %v1581 = vrcp.pop %v1250
        %v1582 = vmul.f32 1.0, %v1581
        %v1583 = vrcp.pop %v1251
        %v1584 = vmul.f32 1.0, %v1583
        %v1585 = vrcp.pop %v1252
        %v1586 = vmul.f32 1.0, %v1585
        %v1587 = vrcp.pop %v1253
        %v1588 = vmul.f32 1.0, %v1587
        %v1589 = vrcp.pop %v1254
        %v1590 = vmul.f32 1.0, %v1589
        %v1591 = vrcp.pop %v1255
        %v1592 = vmul.f32 1.0, %v1591
        %v1593 = vrcp.pop %v1256
        %v1594 = vmul.f32 1.0, %v1593
        %v1595 = vrcp.pop %v1257
        %v1596 = vmul.f32 1.0, %v1595
        %v1597 = vrcp.pop %v1258
        %v1598 = vmul.f32 1.0, %v1597
        %v1599 = vrcp.pop %v1259
        %v1600 = vmul.f32 1.0, %v1599
        %v1601 = vrcp.pop %v1260
        %v1602 = vmul.f32 1.0, %v1601
        %v1603 = vrcp.pop %v1261
        %v1604 = vmul.f32 1.0, %v1603
        %v1605 = vrcp.pop %v1262
        %v1606 = vmul.f32 1.0, %v1605
        %v1607 = vrcp.pop %v1263
        %v1608 = vmul.f32 1.0, %v1607
        %v1609 = vrcp.pop %v1264
        %v1610 = vmul.f32 1.0, %v1609
        %v1611 = vrcp.pop %v1265
        %v1612 = vmul.f32 1.0, %v1611
        %v1613 = vrcp.pop %v1266
        %v1614 = vmul.f32 1.0, %v1613
        %v1615 = vrcp.pop %v1267
        %v1616 = vmul.f32 1.0, %v1615
        %v1617 = vrcp.pop %v1268
        %v1618 = vmul.f32 1.0, %v1617
        %v1619 = vrcp.pop %v1269
        %v1620 = vmul.f32 1.0, %v1619
        %v1621 = vrcp.pop %v1270
        %v1622 = vmul.f32 1.0, %v1621
        %v1623 = vrcp.pop %v1271
        %v1624 = vmul.f32 1.0, %v1623
        %v1625 = vrcp.pop %v1272
        %v1626 = vmul.f32 1.0, %v1625
        %v1627 = vrcp.pop %v1273
        %v1628 = vmul.f32 1.0, %v1627
        %v1629 = vrcp.pop %v1274
        %v1630 = vmul.f32 1.0, %v1629
        %v1631 = vrcp.pop %v1275
        %v1632 = vmul.f32 1.0, %v1631
        %v1633 = vrcp.pop %v1276
        %v1634 = vmul.f32 1.0, %v1633
        %v1635 = vrcp.pop %v1277
        %v1636 = vmul.f32 1.0, %v1635
        %v1637 = vrcp.pop %v1278
        %v1638 = vmul.f32 1.0, %v1637
        %v1639 = vrcp.pop %v1279
        %v1640 = vmul.f32 1.0, %v1639
        %v1641 = vrcp.pop %v1280
        %v1642 = vmul.f32 1.0, %v1641
        %v1643 = vrcp.pop %v1281
        %v1644 = vmul.f32 1.0, %v1643
        %v1645 = vrcp.pop %v1282
        %v1646 = vmul.f32 1.0, %v1645
        %v1647 = vrcp.pop %v1283
        %v1648 = vmul.f32 1.0, %v1647
        %v1649 = vrcp.pop %v1284
        %v1650 = vmul.f32 1.0, %v1649
        %v1651 = vrcp.pop %v1285
        %v1652 = vmul.f32 1.0, %v1651
        %v1653 = vrcp.pop %v1286
        %v1654 = vmul.f32 1.0, %v1653
        %v1655 = vrcp.pop %v1287
        %v1656 = vmul.f32 1.0, %v1655
        %v1657 = vrcp.pop %v1288
        %v1658 = vmul.f32 1.0, %v1657
        %v1659 = vrcp.pop %v1289
        %v1660 = vmul.f32 1.0, %v1659
        %v1661 = vrcp.pop %v1290
        %v1662 = vmul.f32 1.0, %v1661
        %v1663 = vrcp.pop %v1291
        %v1664 = vmul.f32 1.0, %v1663
        %v1665 = vrcp.pop %v1292
        %v1666 = vmul.f32 1.0, %v1665
        %v1667 = vrcp.pop %v1293
        %v1668 = vmul.f32 1.0, %v1667
        %v1669 = vrcp.pop %v1294
        %v1670 = vmul.f32 1.0, %v1669
        %v1671 = vrcp.pop %v1295
        %v1672 = vmul.f32 1.0, %v1671
        %v1673 = vrcp.pop %v1296
        %v1674 = vmul.f32 1.0, %v1673
        %v1675 = vrcp.pop %v1297
        %v1676 = vmul.f32 1.0, %v1675
        %v1677 = vrcp.pop %v1298
        %v1678 = vmul.f32 1.0, %v1677
        %v1679 = vrcp.pop %v1299
        %v1680 = vmul.f32 1.0, %v1679
        %v1681 = vrcp.pop %v1300
        %v1682 = vmul.f32 1.0, %v1681
        %v1683 = vrcp.pop %v1301
        %v1684 = vmul.f32 1.0, %v1683
        %v1685 = vrcp.pop %v1302
        %v1686 = vmul.f32 1.0, %v1685
        %v1687 = vrcp.pop %v1303
        %v1688 = vmul.f32 1.0, %v1687
        %v1689 = vrcp.pop %v1304
        %v1690 = vmul.f32 1.0, %v1689
        %v1691 = vrcp.pop %v1305
        %v1692 = vmul.f32 1.0, %v1691
        %v1693 = vrcp.pop %v1306
        %v1694 = vmul.f32 1.0, %v1693
        %v1695 = vrcp.pop %v1307
        %v1696 = vmul.f32 1.0, %v1695
        %v1697 = vrcp.pop %v1308
        %v1698 = vmul.f32 1.0, %v1697
        %v1699 = vrcp.pop %v1309
        %v1700 = vmul.f32 1.0, %v1699
        %v1701 = vrcp.pop %v1310
        %v1702 = vmul.f32 1.0, %v1701
        %v1703 = vrcp.pop %v1311
        %v1704 = vmul.f32 1.0, %v1703
        %v1705 = vrcp.pop %v1312
        %v1706 = vmul.f32 1.0, %v1705
        %v1707 = vrcp.pop %v1313
        %v1708 = vmul.f32 1.0, %v1707
        %v1709 = vrcp.pop %v1314
        %v1710 = vmul.f32 1.0, %v1709
        %v1711 = vrcp.pop %v1315
        %v1712 = vmul.f32 1.0, %v1711
        %v1713 = vrcp.pop %v1316
        %v1714 = vmul.f32 1.0, %v1713
        %v1715 = vrcp.pop %v1317
        %v1716 = vmul.f32 1.0, %v1715
        %v1717 = vrcp.pop %v1318
        %v1718 = vmul.f32 1.0, %v1717
        %v1719 = vrcp.pop %v1319
        %v1720 = vmul.f32 1.0, %v1719
        %v1721 = vrcp.pop %v1320
        %v1722 = vmul.f32 1.0, %v1721
        %v1723 = vrcp.pop %v1321
        %v1724 = vmul.f32 1.0, %v1723
        %v1725 = vrcp.pop %v1322
        %v1726 = vmul.f32 1.0, %v1725
        %v1727 = vrcp.pop %v1323
        %v1728 = vmul.f32 1.0, %v1727
        %v1729 = vrcp.pop %v1324
        %v1730 = vmul.f32 1.0, %v1729
        %v1731 = vrcp.pop %v1325
        %v1732 = vmul.f32 1.0, %v1731
        %v1733 = vrcp.pop %v1326
        %v1734 = vmul.f32 1.0, %v1733
        %v1735 = vrcp.pop %v1327
        %v1736 = vmul.f32 1.0, %v1735
        %v1737 = vrcp.pop %v1328
        %v1738 = vmul.f32 1.0, %v1737
        %v1739 = vrcp.pop %v1329
        %v1740 = vmul.f32 1.0, %v1739
        %v1741 = vrcp.pop %v1330
        %v1742 = vmul.f32 1.0, %v1741
        %v1743 = vrcp.pop %v1331
        %v1744 = vmul.f32 1.0, %v1743
        %v1745 = vrcp.pop %v1332
        %v1746 = vmul.f32 1.0, %v1745
        %v1747 = vrcp.pop %v1333
        %v1748 = vmul.f32 1.0, %v1747
        %v1749 = vrcp.pop %v1334
        %v1750 = vmul.f32 1.0, %v1749
        %v1751 = vrcp.pop %v1335
        %v1752 = vmul.f32 1.0, %v1751
        %v1753 = vrcp.pop %v1336
        %v1754 = vmul.f32 1.0, %v1753
        %v1755 = vrcp.pop %v1337
        %v1756 = vmul.f32 1.0, %v1755
        %v1757 = vrcp.pop %v1338
        %v1758 = vmul.f32 1.0, %v1757
        %v1759 = vrcp.pop %v1339
        %v1760 = vmul.f32 1.0, %v1759
        %v1761 = vrcp.pop %v1340
        %v1762 = vmul.f32 1.0, %v1761
        %v1763 = vrcp.pop %v1341
        %v1764 = vmul.f32 1.0, %v1763
        %v1765 = vrcp.pop %v1342
        %v1766 = vmul.f32 1.0, %v1765
        %v1767 = vrcp.pop %v1343
        %v1768 = vmul.f32 1.0, %v1767
        %v1769 = vrcp.pop %v1344
        %v1770 = vmul.f32 1.0, %v1769
        %v1771 = vrcp.pop %v1345
        %v1772 = vmul.f32 1.0, %v1771
        %v1773 = vrcp.pop %v1346
        %v1774 = vmul.f32 1.0, %v1773
        %v1775 = vrcp.pop %v1347
        %v1776 = vmul.f32 1.0, %v1775
        %v1777 = vrcp.pop %v1348
        %v1778 = vmul.f32 1.0, %v1777
        %v1779 = vrcp.pop %v1349
        %v1780 = vmul.f32 1.0, %v1779
        %v1781 = vrcp.pop %v1350
        %v1782 = vmul.f32 1.0, %v1781
        %v1783 = vrcp.pop %v1351
        %v1784 = vmul.f32 1.0, %v1783
        %v1785 = vrcp.pop %v1352
        %v1786 = vmul.f32 1.0, %v1785
        %v1787 = vrcp.pop %v1353
        %v1788 = vmul.f32 1.0, %v1787
        %v1789 = vrcp.pop %v1354
        %v1790 = vmul.f32 1.0, %v1789
        %v1791 = vrcp.pop %v1355
        %v1792 = vmul.f32 1.0, %v1791
        %v1793 = vrcp.pop %v1356
        %v1794 = vmul.f32 1.0, %v1793
        %v1795 = vrcp.pop %v1357
        %v1796 = vmul.f32 1.0, %v1795
        %v1797 = vrcp.pop %v1358
        %v1798 = vmul.f32 1.0, %v1797
        %v1799 = vrcp.pop %v1359
        %v1800 = vmul.f32 1.0, %v1799
        %v1801 = vrcp.pop %v1360
        %v1802 = vmul.f32 1.0, %v1801
        %v1803 = vrcp.pop %v1361
        %v1804 = vmul.f32 1.0, %v1803
        %v1805 = vrcp.pop %v1362
        %v1806 = vmul.f32 1.0, %v1805
        %v1807 = vrcp.pop %v1363
        %v1808 = vmul.f32 1.0, %v1807
        %v1809 = vrcp.pop %v1364
        %v1810 = vmul.f32 1.0, %v1809
        %v1811 = vrcp.pop %v1365
        %v1812 = vmul.f32 1.0, %v1811
        %v1813 = vrcp.pop %v1366
        %v1814 = vmul.f32 1.0, %v1813
        %v1815 = vrcp.pop %v1367
        %v1816 = vmul.f32 1.0, %v1815
        %v1817 = vrcp.pop %v1368
        %v1818 = vmul.f32 1.0, %v1817
        %v1819 = vrcp.pop %v1369
        %v1820 = vmul.f32 1.0, %v1819
        %v1821 = vrcp.pop %v1370
        %v1822 = vmul.f32 1.0, %v1821
        %v1823 = vrcp.pop %v1371
        %v1824 = vmul.f32 1.0, %v1823
        %v1825 = vrcp.pop %v1372
        %v1826 = vmul.f32 1.0, %v1825
        %v1827 = vrcp.pop %v1373
        %v1828 = vmul.f32 1.0, %v1827
        %v1829 = vrcp.pop %v1374
        %v1830 = vmul.f32 1.0, %v1829
        %v1831 = vrcp.pop %v1375
        %v1832 = vmul.f32 1.0, %v1831
        %v1833 = vrcp.pop %v1376
        %v1834 = vmul.f32 1.0, %v1833
        %v1835 = vrcp.pop %v1377
        %v1836 = vmul.f32 1.0, %v1835
        %v1837 = vrcp.pop %v1378
        %v1838 = vmul.f32 1.0, %v1837
        %v1839 = vrcp.pop %v1379
        %v1840 = vmul.f32 1.0, %v1839
        %v1841 = vrcp.pop %v1380
        %v1842 = vmul.f32 1.0, %v1841
        %v1843 = vrcp.pop %v1381
        %v1844 = vmul.f32 1.0, %v1843
        %v1845 = vrcp.pop %v1382
        %v1846 = vmul.f32 1.0, %v1845
        %v1847 = vrcp.pop %v1383
        %v1848 = vmul.f32 1.0, %v1847
        %v1849 = vrcp.pop %v1384
        %v1850 = vmul.f32 1.0, %v1849
        %v1851 = vrcp.pop %v1385
        %v1852 = vmul.f32 1.0, %v1851
        %v1853 = vrcp.pop %v1386
        %v1854 = vmul.f32 1.0, %v1853
        %v1855 = vrcp.pop %v1387
        %v1856 = vmul.f32 1.0, %v1855
        %v1857 = vrcp.pop %v1388
        %v1858 = vmul.f32 1.0, %v1857
        %v1859 = vrcp.pop %v1389
        %v1860 = vmul.f32 1.0, %v1859
        %v1861 = vrcp.pop %v1390
        %v1862 = vmul.f32 1.0, %v1861
        %v1863 = vrcp.pop %v1391
        %v1864 = vmul.f32 1.0, %v1863
        %v1865 = vrcp.pop %v1392
        %v1866 = vmul.f32 1.0, %v1865
        %v1867 = vrcp.pop %v1393
        %v1868 = vmul.f32 1.0, %v1867
        %v1869 = vrcp.pop %v1394
        %v1870 = vmul.f32 1.0, %v1869
        %v1871 = vrcp.pop %v1395
        %v1872 = vmul.f32 1.0, %v1871
        %v1873 = vrcp.pop %v1396
        %v1874 = vmul.f32 1.0, %v1873
        %v1875 = vrcp.pop %v1397
        %v1876 = vmul.f32 1.0, %v1875
        %v1877 = vrcp.pop %v1398
        %v1878 = vmul.f32 1.0, %v1877
        %v1879 = vrcp.pop %v1399
        %v1880 = vmul.f32 1.0, %v1879
        %v1881 = vrcp.pop %v1400
        %v1882 = vmul.f32 1.0, %v1881
        %v1883 = vrcp.pop %v1401
        %v1884 = vmul.f32 1.0, %v1883
        %v1885 = vrcp.pop %v1402
        %v1886 = vmul.f32 1.0, %v1885
        %v1887 = vrcp.pop %v1403
        %v1888 = vmul.f32 1.0, %v1887
        %v1889 = vrcp.pop %v1404
        %v1890 = vmul.f32 1.0, %v1889
        %v1891 = vrcp.pop %v1405
        %v1892 = vmul.f32 1.0, %v1891
        %v1893 = vrcp.pop %v1406
        %v1894 = vmul.f32 1.0, %v1893
        %v1895 = vrcp.pop %v1407
        %v1896 = vmul.f32 1.0, %v1895
        %v1897 = vrcp.pop %v1408
        %v1898 = vmul.f32 1.0, %v1897
        %v1899 = vrcp.pop %v1409
        %v1900 = vmul.f32 1.0, %v1899
        %v1901 = vrcp.pop %v1410
        %v1902 = vmul.f32 1.0, %v1901
        %v1903 = vrcp.pop %v1411
        %v1904 = vmul.f32 1.0, %v1903
        %v1905 = vrcp.pop %v1412
        %v1906 = vmul.f32 1.0, %v1905
        %v1907 = vrcp.pop %v1413
        %v1908 = vmul.f32 1.0, %v1907
        %v1909 = vrcp.pop %v1414
        %v1910 = vmul.f32 1.0, %v1909
        %v1911 = vrcp.pop %v1415
        %v1912 = vmul.f32 1.0, %v1911
        %v1913 = vrcp.pop %v1416
        %v1914 = vmul.f32 1.0, %v1913
        %v1915 = vrcp.pop %v1417
        %v1916 = vmul.f32 1.0, %v1915
        %v1917 = vrcp.pop %v1418
        %v1918 = vmul.f32 1.0, %v1917
        %v1919 = vrcp.pop %v1419
        %v1920 = vmul.f32 1.0, %v1919
        %v1921 = vrcp.pop %v1420
        %v1922 = vmul.f32 1.0, %v1921
        %v1923 = vrcp.pop %v1421
        %v1924 = vmul.f32 1.0, %v1923
        %v1925 = vrcp.pop %v1422
        %v1926 = vmul.f32 1.0, %v1925
        %v1927 = vrcp.pop %v1423
        %v1928 = vmul.f32 1.0, %v1927
        %v1929 = vrcp.pop %v1424
        %v1930 = vmul.f32 1.0, %v1929
        %v1931 = vrcp.pop %v1425
        %v1932 = vmul.f32 1.0, %v1931
        %v1933 = vrcp.pop %v1426
        %v1934 = vmul.f32 1.0, %v1933
        %v1935 = vrcp.pop %v1427
        %v1936 = vmul.f32 1.0, %v1935
        %v1937 = vrcp.pop %v1428
        %v1938 = vmul.f32 1.0, %v1937
        %v1939 = vrcp.pop %v1429
        %v1940 = vmul.f32 1.0, %v1939
        %v1941 = vrcp.pop %v1430
        %v1942 = vmul.f32 1.0, %v1941
        %v1943 = vmul.f32 %v151, %v1432
        %v1944 = vmul.f32 %v152, %v1434
        %v1945 = vmul.f32 %v153, %v1436
        %v1946 = vmul.f32 %v154, %v1438
        %v1947 = vmul.f32 %v155, %v1440
        %v1948 = vmul.f32 %v156, %v1442
        %v1949 = vmul.f32 %v157, %v1444
        %v1950 = vmul.f32 %v158, %v1446
        %v1951 = vmul.f32 %v159, %v1448
        %v1952 = vmul.f32 %v160, %v1450
        %v1953 = vmul.f32 %v161, %v1452
        %v1954 = vmul.f32 %v162, %v1454
        %v1955 = vmul.f32 %v163, %v1456
        %v1956 = vmul.f32 %v164, %v1458
        %v1957 = vmul.f32 %v165, %v1460
        %v1958 = vmul.f32 %v166, %v1462
        %v1959 = vmul.f32 %v167, %v1464
        %v1960 = vmul.f32 %v168, %v1466
        %v1961 = vmul.f32 %v169, %v1468
        %v1962 = vmul.f32 %v170, %v1470
        %v1963 = vmul.f32 %v171, %v1472
        %v1964 = vmul.f32 %v172, %v1474
        %v1965 = vmul.f32 %v173, %v1476
        %v1966 = vmul.f32 %v174, %v1478
        %v1967 = vmul.f32 %v175, %v1480
        %v1968 = vmul.f32 %v176, %v1482
        %v1969 = vmul.f32 %v177, %v1484
        %v1970 = vmul.f32 %v178, %v1486
        %v1971 = vmul.f32 %v179, %v1488
        %v1972 = vmul.f32 %v180, %v1490
        %v1973 = vmul.f32 %v181, %v1492
        %v1974 = vmul.f32 %v182, %v1494
        %v1975 = vmul.f32 %v183, %v1496
        %v1976 = vmul.f32 %v184, %v1498
        %v1977 = vmul.f32 %v185, %v1500
        %v1978 = vmul.f32 %v186, %v1502
        %v1979 = vmul.f32 %v187, %v1504
        %v1980 = vmul.f32 %v188, %v1506
        %v1981 = vmul.f32 %v189, %v1508
        %v1982 = vmul.f32 %v190, %v1510
        %v1983 = vmul.f32 %v191, %v1512
        %v1984 = vmul.f32 %v192, %v1514
        %v1985 = vmul.f32 %v193, %v1516
        %v1986 = vmul.f32 %v194, %v1518
        %v1987 = vmul.f32 %v195, %v1520
        %v1988 = vmul.f32 %v196, %v1522
        %v1989 = vmul.f32 %v197, %v1524
        %v1990 = vmul.f32 %v198, %v1526
        %v1991 = vmul.f32 %v199, %v1528
        %v1992 = vmul.f32 %v200, %v1530
        %v1993 = vmul.f32 %v201, %v1532
        %v1994 = vmul.f32 %v202, %v1534
        %v1995 = vmul.f32 %v203, %v1536
        %v1996 = vmul.f32 %v204, %v1538
        %v1997 = vmul.f32 %v205, %v1540
        %v1998 = vmul.f32 %v206, %v1542
        %v1999 = vmul.f32 %v207, %v1544
        %v2000 = vmul.f32 %v208, %v1546
        %v2001 = vmul.f32 %v209, %v1548
        %v2002 = vmul.f32 %v210, %v1550
        %v2003 = vmul.f32 %v211, %v1552
        %v2004 = vmul.f32 %v212, %v1554
        %v2005 = vmul.f32 %v213, %v1556
        %v2006 = vmul.f32 %v214, %v1558
        %v2007 = vmul.f32 %v215, %v1560
        %v2008 = vmul.f32 %v216, %v1562
        %v2009 = vmul.f32 %v217, %v1564
        %v2010 = vmul.f32 %v218, %v1566
        %v2011 = vmul.f32 %v219, %v1568
        %v2012 = vmul.f32 %v220, %v1570
        %v2013 = vmul.f32 %v221, %v1572
        %v2014 = vmul.f32 %v222, %v1574
        %v2015 = vmul.f32 %v223, %v1576
        %v2016 = vmul.f32 %v224, %v1578
        %v2017 = vmul.f32 %v225, %v1580
        %v2018 = vmul.f32 %v226, %v1582
        %v2019 = vmul.f32 %v227, %v1584
        %v2020 = vmul.f32 %v228, %v1586
        %v2021 = vmul.f32 %v229, %v1588
        %v2022 = vmul.f32 %v230, %v1590
        %v2023 = vmul.f32 %v231, %v1592
        %v2024 = vmul.f32 %v232, %v1594
        %v2025 = vmul.f32 %v233, %v1596
        %v2026 = vmul.f32 %v234, %v1598
        %v2027 = vmul.f32 %v235, %v1600
        %v2028 = vmul.f32 %v236, %v1602
        %v2029 = vmul.f32 %v237, %v1604
        %v2030 = vmul.f32 %v238, %v1606
        %v2031 = vmul.f32 %v239, %v1608
        %v2032 = vmul.f32 %v240, %v1610
        %v2033 = vmul.f32 %v241, %v1612
        %v2034 = vmul.f32 %v242, %v1614
        %v2035 = vmul.f32 %v243, %v1616
        %v2036 = vmul.f32 %v244, %v1618
        %v2037 = vmul.f32 %v245, %v1620
        %v2038 = vmul.f32 %v246, %v1622
        %v2039 = vmul.f32 %v247, %v1624
        %v2040 = vmul.f32 %v248, %v1626
        %v2041 = vmul.f32 %v249, %v1628
        %v2042 = vmul.f32 %v250, %v1630
        %v2043 = vmul.f32 %v251, %v1632
        %v2044 = vmul.f32 %v252, %v1634
        %v2045 = vmul.f32 %v253, %v1636
        %v2046 = vmul.f32 %v254, %v1638
        %v2047 = vmul.f32 %v255, %v1640
        %v2048 = vmul.f32 %v256, %v1642
        %v2049 = vmul.f32 %v257, %v1644
        %v2050 = vmul.f32 %v258, %v1646
        %v2051 = vmul.f32 %v259, %v1648
        %v2052 = vmul.f32 %v260, %v1650
        %v2053 = vmul.f32 %v261, %v1652
        %v2054 = vmul.f32 %v262, %v1654
        %v2055 = vmul.f32 %v263, %v1656
        %v2056 = vmul.f32 %v264, %v1658
        %v2057 = vmul.f32 %v265, %v1660
        %v2058 = vmul.f32 %v266, %v1662
        %v2059 = vmul.f32 %v267, %v1664
        %v2060 = vmul.f32 %v268, %v1666
        %v2061 = vmul.f32 %v269, %v1668
        %v2062 = vmul.f32 %v270, %v1670
        %v2063 = vmul.f32 %v271, %v1672
        %v2064 = vmul.f32 %v272, %v1674
        %v2065 = vmul.f32 %v273, %v1676
        %v2066 = vmul.f32 %v274, %v1678
        %v2067 = vmul.f32 %v275, %v1680
        %v2068 = vmul.f32 %v276, %v1682
        %v2069 = vmul.f32 %v277, %v1684
        %v2070 = vmul.f32 %v278, %v1686
        %v2071 = vmul.f32 %v279, %v1688
        %v2072 = vmul.f32 %v280, %v1690
        %v2073 = vmul.f32 %v281, %v1692
        %v2074 = vmul.f32 %v282, %v1694
        %v2075 = vmul.f32 %v283, %v1696
        %v2076 = vmul.f32 %v284, %v1698
        %v2077 = vmul.f32 %v285, %v1700
        %v2078 = vmul.f32 %v286, %v1702
        %v2079 = vmul.f32 %v287, %v1704
        %v2080 = vmul.f32 %v288, %v1706
        %v2081 = vmul.f32 %v289, %v1708
        %v2082 = vmul.f32 %v290, %v1710
        %v2083 = vmul.f32 %v291, %v1712
        %v2084 = vmul.f32 %v292, %v1714
        %v2085 = vmul.f32 %v293, %v1716
        %v2086 = vmul.f32 %v294, %v1718
        %v2087 = vmul.f32 %v295, %v1720
        %v2088 = vmul.f32 %v296, %v1722
        %v2089 = vmul.f32 %v297, %v1724
        %v2090 = vmul.f32 %v298, %v1726
        %v2091 = vmul.f32 %v299, %v1728
        %v2092 = vmul.f32 %v300, %v1730
        %v2093 = vmul.f32 %v301, %v1732
        %v2094 = vmul.f32 %v302, %v1734
        %v2095 = vmul.f32 %v303, %v1736
        %v2096 = vmul.f32 %v304, %v1738
        %v2097 = vmul.f32 %v305, %v1740
        %v2098 = vmul.f32 %v306, %v1742
        %v2099 = vmul.f32 %v307, %v1744
        %v2100 = vmul.f32 %v308, %v1746
        %v2101 = vmul.f32 %v309, %v1748
        %v2102 = vmul.f32 %v310, %v1750
        %v2103 = vmul.f32 %v311, %v1752
        %v2104 = vmul.f32 %v312, %v1754
        %v2105 = vmul.f32 %v313, %v1756
        %v2106 = vmul.f32 %v314, %v1758
        %v2107 = vmul.f32 %v315, %v1760
        %v2108 = vmul.f32 %v316, %v1762
        %v2109 = vmul.f32 %v317, %v1764
        %v2110 = vmul.f32 %v318, %v1766
        %v2111 = vmul.f32 %v319, %v1768
        %v2112 = vmul.f32 %v320, %v1770
        %v2113 = vmul.f32 %v321, %v1772
        %v2114 = vmul.f32 %v322, %v1774
        %v2115 = vmul.f32 %v323, %v1776
        %v2116 = vmul.f32 %v324, %v1778
        %v2117 = vmul.f32 %v325, %v1780
        %v2118 = vmul.f32 %v326, %v1782
        %v2119 = vmul.f32 %v327, %v1784
        %v2120 = vmul.f32 %v328, %v1786
        %v2121 = vmul.f32 %v329, %v1788
        %v2122 = vmul.f32 %v330, %v1790
        %v2123 = vmul.f32 %v331, %v1792
        %v2124 = vmul.f32 %v332, %v1794
        %v2125 = vmul.f32 %v333, %v1796
        %v2126 = vmul.f32 %v334, %v1798
        %v2127 = vmul.f32 %v335, %v1800
        %v2128 = vmul.f32 %v336, %v1802
        %v2129 = vmul.f32 %v337, %v1804
        %v2130 = vmul.f32 %v338, %v1806
        %v2131 = vmul.f32 %v339, %v1808
        %v2132 = vmul.f32 %v340, %v1810
        %v2133 = vmul.f32 %v341, %v1812
        %v2134 = vmul.f32 %v342, %v1814
        %v2135 = vmul.f32 %v343, %v1816
        %v2136 = vmul.f32 %v344, %v1818
        %v2137 = vmul.f32 %v345, %v1820
        %v2138 = vmul.f32 %v346, %v1822
        %v2139 = vmul.f32 %v347, %v1824
        %v2140 = vmul.f32 %v348, %v1826
        %v2141 = vmul.f32 %v349, %v1828
        %v2142 = vmul.f32 %v350, %v1830
        %v2143 = vmul.f32 %v351, %v1832
        %v2144 = vmul.f32 %v352, %v1834
        %v2145 = vmul.f32 %v353, %v1836
        %v2146 = vmul.f32 %v354, %v1838
        %v2147 = vmul.f32 %v355, %v1840
        %v2148 = vmul.f32 %v356, %v1842
        %v2149 = vmul.f32 %v357, %v1844
        %v2150 = vmul.f32 %v358, %v1846
        %v2151 = vmul.f32 %v359, %v1848
        %v2152 = vmul.f32 %v360, %v1850
        %v2153 = vmul.f32 %v361, %v1852
        %v2154 = vmul.f32 %v362, %v1854
        %v2155 = vmul.f32 %v363, %v1856
        %v2156 = vmul.f32 %v364, %v1858
        %v2157 = vmul.f32 %v365, %v1860
        %v2158 = vmul.f32 %v366, %v1862
        %v2159 = vmul.f32 %v367, %v1864
        %v2160 = vmul.f32 %v368, %v1866
        %v2161 = vmul.f32 %v369, %v1868
        %v2162 = vmul.f32 %v370, %v1870
        %v2163 = vmul.f32 %v371, %v1872
        %v2164 = vmul.f32 %v372, %v1874
        %v2165 = vmul.f32 %v373, %v1876
        %v2166 = vmul.f32 %v374, %v1878
        %v2167 = vmul.f32 %v375, %v1880
        %v2168 = vmul.f32 %v376, %v1882
        %v2169 = vmul.f32 %v377, %v1884
        %v2170 = vmul.f32 %v378, %v1886
        %v2171 = vmul.f32 %v379, %v1888
        %v2172 = vmul.f32 %v380, %v1890
        %v2173 = vmul.f32 %v381, %v1892
        %v2174 = vmul.f32 %v382, %v1894
        %v2175 = vmul.f32 %v383, %v1896
        %v2176 = vmul.f32 %v384, %v1898
        %v2177 = vmul.f32 %v385, %v1900
        %v2178 = vmul.f32 %v386, %v1902
        %v2179 = vmul.f32 %v387, %v1904
        %v2180 = vmul.f32 %v388, %v1906
        %v2181 = vmul.f32 %v389, %v1908
        %v2182 = vmul.f32 %v390, %v1910
        %v2183 = vmul.f32 %v391, %v1912
        %v2184 = vmul.f32 %v392, %v1914
        %v2185 = vmul.f32 %v393, %v1916
        %v2186 = vmul.f32 %v394, %v1918
        %v2187 = vmul.f32 %v395, %v1920
        %v2188 = vmul.f32 %v396, %v1922
        %v2189 = vmul.f32 %v397, %v1924
        %v2190 = vmul.f32 %v398, %v1926
        %v2191 = vmul.f32 %v399, %v1928
        %v2192 = vmul.f32 %v400, %v1930
        %v2193 = vmul.f32 %v401, %v1932
        %v2194 = vmul.f32 %v402, %v1934
        %v2195 = vmul.f32 %v403, %v1936
        %v2196 = vmul.f32 %v404, %v1938
        %v2197 = vmul.f32 %v405, %v1940
        %v2198 = vmul.f32 %v406, %v1942
        %2199 = vst [vmem:[%s140] sm:$0xff] %v1943
        %2200 = vst [vmem:[%s140 + $0x8] sm:$0xff] %v1944
        %2201 = vst [vmem:[%s140 + $0x10] sm:$0xff] %v1945
        %2202 = vst [vmem:[%s140 + $0x18] sm:$0xff] %v1946
        %2203 = vst [vmem:[%s140 + $0x20] sm:$0xff] %v1947
        %2204 = vst [vmem:[%s140 + $0x28] sm:$0xff] %v1948
        %2205 = vst [vmem:[%s140 + $0x30] sm:$0xff] %v1949
        %2206 = vst [vmem:[%s140 + $0x38] sm:$0xff] %v1950
        %2207 = vst [vmem:[%s140 + $0x40] sm:$0xff] %v1951
        %2208 = vst [vmem:[%s140 + $0x48] sm:$0xff] %v1952
        %2209 = vst [vmem:[%s140 + $0x50] sm:$0xff] %v1953
        %2210 = vst [vmem:[%s140 + $0x58] sm:$0xff] %v1954
        %2211 = vst [vmem:[%s140 + $0x60] sm:$0xff] %v1955
        %2212 = vst [vmem:[%s140 + $0x68] sm:$0xff] %v1956
        %2213 = vst [vmem:[%s140 + $0x70] sm:$0xff] %v1957
        %2214 = vst [vmem:[%s140 + $0x78] sm:$0xff] %v1958
        %2215 = vst [vmem:[%s140 + $0x80] sm:$0xff] %v1959
        %2216 = vst [vmem:[%s140 + $0x88] sm:$0xff] %v1960
        %2217 = vst [vmem:[%s140 + $0x90] sm:$0xff] %v1961
        %2218 = vst [vmem:[%s140 + $0x98] sm:$0xff] %v1962
        %2219 = vst [vmem:[%s140 + $0xa0] sm:$0xff] %v1963
        %2220 = vst [vmem:[%s140 + $0xa8] sm:$0xff] %v1964
        %2221 = vst [vmem:[%s140 + $0xb0] sm:$0xff] %v1965
        %2222 = vst [vmem:[%s140 + $0xb8] sm:$0xff] %v1966
        %2223 = vst [vmem:[%s140 + $0xc0] sm:$0xff] %v1967
        %2224 = vst [vmem:[%s140 + $0xc8] sm:$0xff] %v1968
        %2225 = vst [vmem:[%s140 + $0xd0] sm:$0xff] %v1969
        %2226 = vst [vmem:[%s140 + $0xd8] sm:$0xff] %v1970
        %2227 = vst [vmem:[%s140 + $0xe0] sm:$0xff] %v1971
        %2228 = vst [vmem:[%s140 + $0xe8] sm:$0xff] %v1972
        %2229 = vst [vmem:[%s140 + $0xf0] sm:$0xff] %v1973
        %2230 = vst [vmem:[%s140 + $0xf8] sm:$0xff] %v1974
        %2231 = vst [vmem:[%s140 + $0x100] sm:$0xff] %v1975
        %2232 = vst [vmem:[%s140 + $0x108] sm:$0xff] %v1976
        %2233 = vst [vmem:[%s140 + $0x110] sm:$0xff] %v1977
        %2234 = vst [vmem:[%s140 + $0x118] sm:$0xff] %v1978
        %2235 = vst [vmem:[%s140 + $0x120] sm:$0xff] %v1979
        %2236 = vst [vmem:[%s140 + $0x128] sm:$0xff] %v1980
        %2237 = vst [vmem:[%s140 + $0x130] sm:$0xff] %v1981
        %2238 = vst [vmem:[%s140 + $0x138] sm:$0xff] %v1982
        %2239 = vst [vmem:[%s140 + $0x140] sm:$0xff] %v1983
        %2240 = vst [vmem:[%s140 + $0x148] sm:$0xff] %v1984
        %2241 = vst [vmem:[%s140 + $0x150] sm:$0xff] %v1985
        %2242 = vst [vmem:[%s140 + $0x158] sm:$0xff] %v1986
        %2243 = vst [vmem:[%s140 + $0x160] sm:$0xff] %v1987
        %2244 = vst [vmem:[%s140 + $0x168] sm:$0xff] %v1988
        %2245 = vst [vmem:[%s140 + $0x170] sm:$0xff] %v1989
        %2246 = vst [vmem:[%s140 + $0x178] sm:$0xff] %v1990
        %2247 = vst [vmem:[%s140 + $0x180] sm:$0xff] %v1991
        %2248 = vst [vmem:[%s140 + $0x188] sm:$0xff] %v1992
        %2249 = vst [vmem:[%s140 + $0x190] sm:$0xff] %v1993
        %2250 = vst [vmem:[%s140 + $0x198] sm:$0xff] %v1994
        %2251 = vst [vmem:[%s140 + $0x1a0] sm:$0xff] %v1995
        %2252 = vst [vmem:[%s140 + $0x1a8] sm:$0xff] %v1996
        %2253 = vst [vmem:[%s140 + $0x1b0] sm:$0xff] %v1997
        %2254 = vst [vmem:[%s140 + $0x1b8] sm:$0xff] %v1998
        %2255 = vst [vmem:[%s140 + $0x1c0] sm:$0xff] %v1999
        %2256 = vst [vmem:[%s140 + $0x1c8] sm:$0xff] %v2000
        %2257 = vst [vmem:[%s140 + $0x1d0] sm:$0xff] %v2001
        %2258 = vst [vmem:[%s140 + $0x1d8] sm:$0xff] %v2002
        %2259 = vst [vmem:[%s140 + $0x1e0] sm:$0xff] %v2003
        %2260 = vst [vmem:[%s140 + $0x1e8] sm:$0xff] %v2004
        %2261 = vst [vmem:[%s140 + $0x1f0] sm:$0xff] %v2005
        %2262 = vst [vmem:[%s140 + $0x1f8] sm:$0xff] %v2006
        %2263 = vst [vmem:[%s140 + $0x200] sm:$0xff] %v2007
        %2264 = vst [vmem:[%s140 + $0x208] sm:$0xff] %v2008
        %2265 = vst [vmem:[%s140 + $0x210] sm:$0xff] %v2009
        %2266 = vst [vmem:[%s140 + $0x218] sm:$0xff] %v2010
        %2267 = vst [vmem:[%s140 + $0x220] sm:$0xff] %v2011
        %2268 = vst [vmem:[%s140 + $0x228] sm:$0xff] %v2012
        %2269 = vst [vmem:[%s140 + $0x230] sm:$0xff] %v2013
        %2270 = vst [vmem:[%s140 + $0x238] sm:$0xff] %v2014
        %2271 = vst [vmem:[%s140 + $0x240] sm:$0xff] %v2015
        %2272 = vst [vmem:[%s140 + $0x248] sm:$0xff] %v2016
        %2273 = vst [vmem:[%s140 + $0x250] sm:$0xff] %v2017
        %2274 = vst [vmem:[%s140 + $0x258] sm:$0xff] %v2018
        %2275 = vst [vmem:[%s140 + $0x260] sm:$0xff] %v2019
        %2276 = vst [vmem:[%s140 + $0x268] sm:$0xff] %v2020
        %2277 = vst [vmem:[%s140 + $0x270] sm:$0xff] %v2021
        %2278 = vst [vmem:[%s140 + $0x278] sm:$0xff] %v2022
        %2279 = vst [vmem:[%s140 + $0x280] sm:$0xff] %v2023
        %2280 = vst [vmem:[%s140 + $0x288] sm:$0xff] %v2024
        %2281 = vst [vmem:[%s140 + $0x290] sm:$0xff] %v2025
        %2282 = vst [vmem:[%s140 + $0x298] sm:$0xff] %v2026
        %2283 = vst [vmem:[%s140 + $0x2a0] sm:$0xff] %v2027
        %2284 = vst [vmem:[%s140 + $0x2a8] sm:$0xff] %v2028
        %2285 = vst [vmem:[%s140 + $0x2b0] sm:$0xff] %v2029
        %2286 = vst [vmem:[%s140 + $0x2b8] sm:$0xff] %v2030
        %2287 = vst [vmem:[%s140 + $0x2c0] sm:$0xff] %v2031
        %2288 = vst [vmem:[%s140 + $0x2c8] sm:$0xff] %v2032
        %2289 = vst [vmem:[%s140 + $0x2d0] sm:$0xff] %v2033
        %2290 = vst [vmem:[%s140 + $0x2d8] sm:$0xff] %v2034
        %2291 = vst [vmem:[%s140 + $0x2e0] sm:$0xff] %v2035
        %2292 = vst [vmem:[%s140 + $0x2e8] sm:$0xff] %v2036
        %2293 = vst [vmem:[%s140 + $0x2f0] sm:$0xff] %v2037
        %2294 = vst [vmem:[%s140 + $0x2f8] sm:$0xff] %v2038
        %2295 = vst [vmem:[%s140 + $0x300] sm:$0xff] %v2039
        %2296 = vst [vmem:[%s140 + $0x308] sm:$0xff] %v2040
        %2297 = vst [vmem:[%s140 + $0x310] sm:$0xff] %v2041
        %2298 = vst [vmem:[%s140 + $0x318] sm:$0xff] %v2042
        %2299 = vst [vmem:[%s140 + $0x320] sm:$0xff] %v2043
        %2300 = vst [vmem:[%s140 + $0x328] sm:$0xff] %v2044
        %2301 = vst [vmem:[%s140 + $0x330] sm:$0xff] %v2045
        %2302 = vst [vmem:[%s140 + $0x338] sm:$0xff] %v2046
        %2303 = vst [vmem:[%s140 + $0x340] sm:$0xff] %v2047
        %2304 = vst [vmem:[%s140 + $0x348] sm:$0xff] %v2048
        %2305 = vst [vmem:[%s140 + $0x350] sm:$0xff] %v2049
        %2306 = vst [vmem:[%s140 + $0x358] sm:$0xff] %v2050
        %2307 = vst [vmem:[%s140 + $0x360] sm:$0xff] %v2051
        %2308 = vst [vmem:[%s140 + $0x368] sm:$0xff] %v2052
        %2309 = vst [vmem:[%s140 + $0x370] sm:$0xff] %v2053
        %2310 = vst [vmem:[%s140 + $0x378] sm:$0xff] %v2054
        %2311 = vst [vmem:[%s140 + $0x380] sm:$0xff] %v2055
        %2312 = vst [vmem:[%s140 + $0x388] sm:$0xff] %v2056
        %2313 = vst [vmem:[%s140 + $0x390] sm:$0xff] %v2057
        %2314 = vst [vmem:[%s140 + $0x398] sm:$0xff] %v2058
        %2315 = vst [vmem:[%s140 + $0x3a0] sm:$0xff] %v2059
        %2316 = vst [vmem:[%s140 + $0x3a8] sm:$0xff] %v2060
        %2317 = vst [vmem:[%s140 + $0x3b0] sm:$0xff] %v2061
        %2318 = vst [vmem:[%s140 + $0x3b8] sm:$0xff] %v2062
        %2319 = vst [vmem:[%s140 + $0x3c0] sm:$0xff] %v2063
        %2320 = vst [vmem:[%s140 + $0x3c8] sm:$0xff] %v2064
        %2321 = vst [vmem:[%s140 + $0x3d0] sm:$0xff] %v2065
        %2322 = vst [vmem:[%s140 + $0x3d8] sm:$0xff] %v2066
        %2323 = vst [vmem:[%s140 + $0x3e0] sm:$0xff] %v2067
        %2324 = vst [vmem:[%s140 + $0x3e8] sm:$0xff] %v2068
        %2325 = vst [vmem:[%s140 + $0x3f0] sm:$0xff] %v2069
        %2326 = vst [vmem:[%s140 + $0x3f8] sm:$0xff] %v2070
        %2327 = vst [vmem:[%s140 + $0x400] sm:$0xff] %v2071
        %2328 = vst [vmem:[%s140 + $0x408] sm:$0xff] %v2072
        %2329 = vst [vmem:[%s140 + $0x410] sm:$0xff] %v2073
        %2330 = vst [vmem:[%s140 + $0x418] sm:$0xff] %v2074
        %2331 = vst [vmem:[%s140 + $0x420] sm:$0xff] %v2075
        %2332 = vst [vmem:[%s140 + $0x428] sm:$0xff] %v2076
        %2333 = vst [vmem:[%s140 + $0x430] sm:$0xff] %v2077
        %2334 = vst [vmem:[%s140 + $0x438] sm:$0xff] %v2078
        %2335 = vst [vmem:[%s140 + $0x440] sm:$0xff] %v2079
        %2336 = vst [vmem:[%s140 + $0x448] sm:$0xff] %v2080
        %2337 = vst [vmem:[%s140 + $0x450] sm:$0xff] %v2081
        %2338 = vst [vmem:[%s140 + $0x458] sm:$0xff] %v2082
        %2339 = vst [vmem:[%s140 + $0x460] sm:$0xff] %v2083
        %2340 = vst [vmem:[%s140 + $0x468] sm:$0xff] %v2084
        %2341 = vst [vmem:[%s140 + $0x470] sm:$0xff] %v2085
        %2342 = vst [vmem:[%s140 + $0x478] sm:$0xff] %v2086
        %2343 = vst [vmem:[%s140 + $0x480] sm:$0xff] %v2087
        %2344 = vst [vmem:[%s140 + $0x488] sm:$0xff] %v2088
        %2345 = vst [vmem:[%s140 + $0x490] sm:$0xff] %v2089
        %2346 = vst [vmem:[%s140 + $0x498] sm:$0xff] %v2090
        %2347 = vst [vmem:[%s140 + $0x4a0] sm:$0xff] %v2091
        %2348 = vst [vmem:[%s140 + $0x4a8] sm:$0xff] %v2092
        %2349 = vst [vmem:[%s140 + $0x4b0] sm:$0xff] %v2093
        %2350 = vst [vmem:[%s140 + $0x4b8] sm:$0xff] %v2094
        %2351 = vst [vmem:[%s140 + $0x4c0] sm:$0xff] %v2095
        %2352 = vst [vmem:[%s140 + $0x4c8] sm:$0xff] %v2096
        %2353 = vst [vmem:[%s140 + $0x4d0] sm:$0xff] %v2097
        %2354 = vst [vmem:[%s140 + $0x4d8] sm:$0xff] %v2098
        %2355 = vst [vmem:[%s140 + $0x4e0] sm:$0xff] %v2099
        %2356 = vst [vmem:[%s140 + $0x4e8] sm:$0xff] %v2100
        %2357 = vst [vmem:[%s140 + $0x4f0] sm:$0xff] %v2101
        %2358 = vst [vmem:[%s140 + $0x4f8] sm:$0xff] %v2102
        %2359 = vst [vmem:[%s140 + $0x500] sm:$0xff] %v2103
        %2360 = vst [vmem:[%s140 + $0x508] sm:$0xff] %v2104
        %2361 = vst [vmem:[%s140 + $0x510] sm:$0xff] %v2105
        %2362 = vst [vmem:[%s140 + $0x518] sm:$0xff] %v2106
        %2363 = vst [vmem:[%s140 + $0x520] sm:$0xff] %v2107
        %2364 = vst [vmem:[%s140 + $0x528] sm:$0xff] %v2108
        %2365 = vst [vmem:[%s140 + $0x530] sm:$0xff] %v2109
        %2366 = vst [vmem:[%s140 + $0x538] sm:$0xff] %v2110
        %2367 = vst [vmem:[%s140 + $0x540] sm:$0xff] %v2111
        %2368 = vst [vmem:[%s140 + $0x548] sm:$0xff] %v2112
        %2369 = vst [vmem:[%s140 + $0x550] sm:$0xff] %v2113
        %2370 = vst [vmem:[%s140 + $0x558] sm:$0xff] %v2114
        %2371 = vst [vmem:[%s140 + $0x560] sm:$0xff] %v2115
        %2372 = vst [vmem:[%s140 + $0x568] sm:$0xff] %v2116
        %2373 = vst [vmem:[%s140 + $0x570] sm:$0xff] %v2117
        %2374 = vst [vmem:[%s140 + $0x578] sm:$0xff] %v2118
        %2375 = vst [vmem:[%s140 + $0x580] sm:$0xff] %v2119
        %2376 = vst [vmem:[%s140 + $0x588] sm:$0xff] %v2120
        %2377 = vst [vmem:[%s140 + $0x590] sm:$0xff] %v2121
        %2378 = vst [vmem:[%s140 + $0x598] sm:$0xff] %v2122
        %2379 = vst [vmem:[%s140 + $0x5a0] sm:$0xff] %v2123
        %2380 = vst [vmem:[%s140 + $0x5a8] sm:$0xff] %v2124
        %2381 = vst [vmem:[%s140 + $0x5b0] sm:$0xff] %v2125
        %2382 = vst [vmem:[%s140 + $0x5b8] sm:$0xff] %v2126
        %2383 = vst [vmem:[%s140 + $0x5c0] sm:$0xff] %v2127
        %2384 = vst [vmem:[%s140 + $0x5c8] sm:$0xff] %v2128
        %2385 = vst [vmem:[%s140 + $0x5d0] sm:$0xff] %v2129
        %2386 = vst [vmem:[%s140 + $0x5d8] sm:$0xff] %v2130
        %2387 = vst [vmem:[%s140 + $0x5e0] sm:$0xff] %v2131
        %2388 = vst [vmem:[%s140 + $0x5e8] sm:$0xff] %v2132
        %2389 = vst [vmem:[%s140 + $0x5f0] sm:$0xff] %v2133
        %2390 = vst [vmem:[%s140 + $0x5f8] sm:$0xff] %v2134
        %2391 = vst [vmem:[%s140 + $0x600] sm:$0xff] %v2135
        %2392 = vst [vmem:[%s140 + $0x608] sm:$0xff] %v2136
        %2393 = vst [vmem:[%s140 + $0x610] sm:$0xff] %v2137
        %2394 = vst [vmem:[%s140 + $0x618] sm:$0xff] %v2138
        %2395 = vst [vmem:[%s140 + $0x620] sm:$0xff] %v2139
        %2396 = vst [vmem:[%s140 + $0x628] sm:$0xff] %v2140
        %2397 = vst [vmem:[%s140 + $0x630] sm:$0xff] %v2141
        %2398 = vst [vmem:[%s140 + $0x638] sm:$0xff] %v2142
        %2399 = vst [vmem:[%s140 + $0x640] sm:$0xff] %v2143
        %2400 = vst [vmem:[%s140 + $0x648] sm:$0xff] %v2144
        %2401 = vst [vmem:[%s140 + $0x650] sm:$0xff] %v2145
        %2402 = vst [vmem:[%s140 + $0x658] sm:$0xff] %v2146
        %2403 = vst [vmem:[%s140 + $0x660] sm:$0xff] %v2147
        %2404 = vst [vmem:[%s140 + $0x668] sm:$0xff] %v2148
        %2405 = vst [vmem:[%s140 + $0x670] sm:$0xff] %v2149
        %2406 = vst [vmem:[%s140 + $0x678] sm:$0xff] %v2150
        %2407 = vst [vmem:[%s140 + $0x680] sm:$0xff] %v2151
        %2408 = vst [vmem:[%s140 + $0x688] sm:$0xff] %v2152
        %2409 = vst [vmem:[%s140 + $0x690] sm:$0xff] %v2153
        %2410 = vst [vmem:[%s140 + $0x698] sm:$0xff] %v2154
        %2411 = vst [vmem:[%s140 + $0x6a0] sm:$0xff] %v2155
        %2412 = vst [vmem:[%s140 + $0x6a8] sm:$0xff] %v2156
        %2413 = vst [vmem:[%s140 + $0x6b0] sm:$0xff] %v2157
        %2414 = vst [vmem:[%s140 + $0x6b8] sm:$0xff] %v2158
        %2415 = vst [vmem:[%s140 + $0x6c0] sm:$0xff] %v2159
        %2416 = vst [vmem:[%s140 + $0x6c8] sm:$0xff] %v2160
        %2417 = vst [vmem:[%s140 + $0x6d0] sm:$0xff] %v2161
        %2418 = vst [vmem:[%s140 + $0x6d8] sm:$0xff] %v2162
        %2419 = vst [vmem:[%s140 + $0x6e0] sm:$0xff] %v2163
        %2420 = vst [vmem:[%s140 + $0x6e8] sm:$0xff] %v2164
        %2421 = vst [vmem:[%s140 + $0x6f0] sm:$0xff] %v2165
        %2422 = vst [vmem:[%s140 + $0x6f8] sm:$0xff] %v2166
        %2423 = vst [vmem:[%s140 + $0x700] sm:$0xff] %v2167
        %2424 = vst [vmem:[%s140 + $0x708] sm:$0xff] %v2168
        %2425 = vst [vmem:[%s140 + $0x710] sm:$0xff] %v2169
        %2426 = vst [vmem:[%s140 + $0x718] sm:$0xff] %v2170
        %2427 = vst [vmem:[%s140 + $0x720] sm:$0xff] %v2171
        %2428 = vst [vmem:[%s140 + $0x728] sm:$0xff] %v2172
        %2429 = vst [vmem:[%s140 + $0x730] sm:$0xff] %v2173
        %2430 = vst [vmem:[%s140 + $0x738] sm:$0xff] %v2174
        %2431 = vst [vmem:[%s140 + $0x740] sm:$0xff] %v2175
        %2432 = vst [vmem:[%s140 + $0x748] sm:$0xff] %v2176
        %2433 = vst [vmem:[%s140 + $0x750] sm:$0xff] %v2177
        %2434 = vst [vmem:[%s140 + $0x758] sm:$0xff] %v2178
        %2435 = vst [vmem:[%s140 + $0x760] sm:$0xff] %v2179
        %2436 = vst [vmem:[%s140 + $0x768] sm:$0xff] %v2180
        %2437 = vst [vmem:[%s140 + $0x770] sm:$0xff] %v2181
        %2438 = vst [vmem:[%s140 + $0x778] sm:$0xff] %v2182
        %2439 = vst [vmem:[%s140 + $0x780] sm:$0xff] %v2183
        %2440 = vst [vmem:[%s140 + $0x788] sm:$0xff] %v2184
        %2441 = vst [vmem:[%s140 + $0x790] sm:$0xff] %v2185
        %2442 = vst [vmem:[%s140 + $0x798] sm:$0xff] %v2186
        %2443 = vst [vmem:[%s140 + $0x7a0] sm:$0xff] %v2187
        %2444 = vst [vmem:[%s140 + $0x7a8] sm:$0xff] %v2188
        %2445 = vst [vmem:[%s140 + $0x7b0] sm:$0xff] %v2189
        %2446 = vst [vmem:[%s140 + $0x7b8] sm:$0xff] %v2190
        %2447 = vst [vmem:[%s140 + $0x7c0] sm:$0xff] %v2191
        %2448 = vst [vmem:[%s140 + $0x7c8] sm:$0xff] %v2192
        %2449 = vst [vmem:[%s140 + $0x7d0] sm:$0xff] %v2193
        %2450 = vst [vmem:[%s140 + $0x7d8] sm:$0xff] %v2194
        %2451 = vst [vmem:[%s140 + $0x7e0] sm:$0xff] %v2195
        %2452 = vst [vmem:[%s140 + $0x7e8] sm:$0xff] %v2196
        %2453 = vst [vmem:[%s140 + $0x7f0] sm:$0xff] %v2197
        %2454 = vst [vmem:[%s140 + $0x7f8] sm:$0xff] %v2198
        %s2455 = sand.u32 %s52, 1
        %s2456 = scalar_lea.sflag [#allocation4], %s2455
        %s2457 = sand.u32 %s52, 1
        %s2458 = smul.addr %s2457, 2048
        %s2459 = scalar_lea.vmem [#allocation5], %s2458
        // Predicated region
        $region29: #{tpu_custom_call.1} parent=23 // pred_check
          %p2460 = pneg %p62
        $region30: #{tpu_custom_call.1} parent=23 // pred_check_branch
          %2462 = sbr.rel (%p2460) target = $region32
        $region31: #{tpu_custom_call.1} parent=23 // pred_region
          %s2463 = smul.u32 256, %s18
          %s2464 = ssub.s32 504, %s2463
          %p2465 = scmp.lt.s32.totalorder %s2464, 256
          %s2466 = scalar_select %p2465, %s2464, 256
          %s2467 = smul.u32 128, %s2466
          %s2469 = ssub.s32 32768, %s2467
          %2470 = vsyncadd %s2456, %s2469
          %p2471 = scmp.ne.s32.totalorder 0, %s2467
          %s2472 = smul.addr %s2463, 128
          %s2473 = scalar_lea.hbm %s1, %s2472
          %s2474 = smul.u32 8, %s2466
          %s2475 = sshll.u32 %s2459, 4
          %s2476 = int_to_ptr.vmem [resolvable:$true] %s2475
          %s2477 = sshll.u32 %s2474, 4
          %2481 = dma.vmem_to_hbm [thread:$0]  (%p2471), %s2476, %s2477, %s2473, %s2456, 128, 128, 8
        $region32: #{tpu_custom_call.1} parent=23 // pred_fallthru
          _
      $region24: #{tpu_custom_call.1} parent=5 // pred_fallthru
        _
      %p2482 = scmp.le.s32.totalorder 2, %s13
      // Predicated region
      $region33: #{tpu_custom_call.1} parent=5 // pred_check
        %p2483 = pneg %p2482
      $region34: #{tpu_custom_call.1} parent=5 // pred_check_branch
        %2485 = sbr.rel (%p2483) target = $region36
      $region35: #{tpu_custom_call.1} parent=5 // pred_region
        %s2486 = ssub.s32 %s13, 2
        // Predicated region
        $region37: #{tpu_custom_call.1} parent=35 // pred_check
          %p2487 = pneg %p68
        $region38: #{tpu_custom_call.1} parent=35 // pred_check_branch
          %2489 = sbr.rel (%p2487) target = $region40
        $region39: #{tpu_custom_call.1} parent=35 // pred_region
          %s2490 = sand.u32 %s53, 1
          %s2491 = scalar_lea.sflag [#allocation4], %s2490
          %s2492 = sand.u32 %s53, 1
          %s2493 = smul.addr %s2492, 2048
          %s2494 = scalar_lea.vmem [#allocation5], %s2493
          %2495 = dma.done %s2491, 32768
        $region40: #{tpu_custom_call.1} parent=35 // pred_fallthru
          _
      $region36: #{tpu_custom_call.1} parent=5 // pred_fallthru
        _
    $region6: #{tpu_custom_call.1} parent=1 // loop_footer
      %s17 = sadd.s32 1, %s13
    $region7: #{tpu_custom_call.1} parent=1 // loop_footer_branch
      %12 = sbr.rel target = $region3
    $region8: #{tpu_custom_call.1} parent=1 // loop_exit
      _
    %2496 = vsyncpa [#allocation3], 1
    %s2497 = scalar_lea.sflag [#allocation3], 1
    %2498 = vsyncpa %s2497, 1
    %2499 = vsyncpa [#allocation4], 1
    %s2500 = scalar_lea.sflag [#allocation4], 1
    %2501 = vsyncpa %s2500, 1

</llo_original>
